<compile_context>
chip_gen: v6e
topology: v6e:2x2x1
jax: 0.10.0
libtpu: 0.0.40
codegen_flags: <defaults>
</compile_context>

<pallas_src>
import functools

import jax
import jax.numpy as jnp
from jax.experimental import pallas as pl
from jax.experimental.pallas import tpu as pltpu


# ---------------------------------------------------------------------------
# In-kernel helpers
# ---------------------------------------------------------------------------

def _pixel_coords(base, flow_nb, sy, sx):
    """Composed grid_sample pixel coordinates for one batch element.

    base   : (2, TP) f32   precomputed  idx*S/(S-1) - 0.5   (row, col)
    flow_nb: (2, TP)       displacement (row, col)
    returns ypix, xpix, each (1, TP) f32.
    """
    fl = flow_nb.astype(jnp.float32)
    ypix = base[0:1, :] + fl[0:1, :] * sy
    xpix = base[1:2, :] + fl[1:2, :] * sx
    return ypix, xpix


def _corner_weights(pix, size):
    """Bilinear corner weights + int corner indices along one axis.

    Out-of-range corners are clamped to -1 / size so that comparing against an
    iota over [0, size) never matches -> 'zeros' padding for free.
    """
    p0f = jnp.floor(pix)
    w1 = pix - p0f
    w0 = 1.0 - w1
    i0 = jnp.clip(p0f, -1.0, float(size)).astype(jnp.int32)
    i1 = jnp.clip(p0f + 1.0, -1.0, float(size)).astype(jnp.int32)
    return w0, w1, i0, i1


def _combined_kernel(base_ref, flow_ref, src_ref, out_ref, *,
                     nb_block, h, w, sy, sx):
    """Small-image path: one bilinear one-hot matmul per batch element.

    base_ref: (2, TP)        src_ref: (NB, C, H*W)
    flow_ref: (NB, 2, TP)    out_ref: (NB, C, TP)
    """
    p_src = h * w
    tp = out_ref.shape[-1]
    base = base_ref[...]
    f_iota = jax.lax.broadcasted_iota(jnp.int32, (p_src, tp), 0)

    for nb in range(nb_block):
        ypix, xpix = _pixel_coords(base, flow_ref[nb], sy, sx)
        y0f = jnp.floor(ypix)
        x0f = jnp.floor(xpix)
        wy1 = ypix - y0f
        wx1 = xpix - x0f
        wy0 = 1.0 - wy1
        wx0 = 1.0 - wx1
        # Per-corner validity ('zeros' padding) ...
        vy0 = ((y0f >= 0.0) & (y0f <= h - 1.0)).astype(jnp.float32)
        vy1 = ((y0f >= -1.0) & (y0f <= h - 2.0)).astype(jnp.float32)
        vx0 = ((x0f >= 0.0) & (x0f <= w - 1.0)).astype(jnp.float32)
        vx1 = ((x0f >= -1.0) & (x0f <= w - 2.0)).astype(jnp.float32)
        # ... and indices clamped into range.  A masked (invalid) corner may then
        # collide with a valid flat index, but its weight is already zero.
        y0 = jnp.clip(y0f, 0.0, h - 1.0).astype(jnp.int32)
        y1 = jnp.clip(y0f + 1.0, 0.0, h - 1.0).astype(jnp.int32)
        x0 = jnp.clip(x0f, 0.0, w - 1.0).astype(jnp.int32)
        x1 = jnp.clip(x0f + 1.0, 0.0, w - 1.0).astype(jnp.int32)

        w00 = wy0 * wx0 * vy0 * vx0
        w01 = wy0 * wx1 * vy0 * vx1
        w10 = wy1 * wx0 * vy1 * vx0
        w11 = wy1 * wx1 * vy1 * vx1
        f00 = y0 * w + x0
        f01 = y0 * w + x1
        f10 = y1 * w + x0
        f11 = y1 * w + x1

        bmat = (jnp.where(f_iota == f00, w00, 0.0)
                + jnp.where(f_iota == f01, w01, 0.0)
                + jnp.where(f_iota == f10, w10, 0.0)
                + jnp.where(f_iota == f11, w11, 0.0))          # (H*W, TP)

        out_nb = jnp.dot(src_ref[nb].astype(jnp.float32), bmat,
                         preferred_element_type=jnp.float32)   # (C, TP)
        out_ref[nb] = out_nb.astype(out_ref.dtype)


def _separable_kernel(base_ref, flow_ref, src_ref, out_ref, *,
                      nb_block, c, h, w, h_pad, sy, sx, exact_onehot):
    """General path: interpolate along W on the MXU (Stage A), then weight by the
    row one-hot and reduce over H with a constant 0/1 segment-sum matmul (Stage B).

    base_ref: (2, TP)        src_ref: (NB, C*H_pad, W)   (H zero-padded to mult of 8)
    flow_ref: (NB, 2, TP)    out_ref: (NB, C, TP)
    """
    tp = out_ref.shape[-1]
    base = base_ref[...]
    h_iota = jax.lax.broadcasted_iota(jnp.int32, (h_pad, tp), 0)
    w_iota = jax.lax.broadcasted_iota(jnp.int32, (w, tp), 0)
    # Constant segment-sum matrix: seg[ci, r] = 1  iff  r // h_pad == ci.
    r_iota = jax.lax.broadcasted_iota(jnp.int32, (c, c * h_pad), 1)
    c_iota = jax.lax.broadcasted_iota(jnp.int32, (c, c * h_pad), 0)
    seg = ((r_iota >= c_iota * h_pad)
           & (r_iota < (c_iota + 1) * h_pad)).astype(jnp.float32)

    for nb in range(nb_block):
        ypix, xpix = _pixel_coords(base, flow_ref[nb], sy, sx)
        wy0, wy1, y0, y1 = _corner_weights(ypix, h)
        wx0, wx1, x0, x1 = _corner_weights(xpix, w)

        # Row one-hot: OOB corners clamp to -1 / h and never match h_iota; padded
        # rows h..h_pad-1 only ever hit zero source rows.
        ry = (jnp.where(h_iota == y0, wy0, 0.0)
              + jnp.where(h_iota == y1, wy1, 0.0))             # (h_pad, TP)

        src_nb = src_ref[nb]                                    # (C*h_pad, W)
        if exact_onehot:
            # bf16 inputs: exact gather -- 0/1 one-hots at bf16 MXU rate, bilinear
            # weights applied afterwards in f32 (no weight rounding error).
            e0 = (w_iota == x0).astype(jnp.bfloat16)
            e1 = (w_iota == x1).astype(jnp.bfloat16)
            t0 = jnp.dot(src_nb, e0, preferred_element_type=jnp.float32)
            t1 = jnp.dot(src_nb, e1, preferred_element_type=jnp.float32)
            tmp = wx0 * t0 + wx1 * t1                           # (C*h_pad, TP) f32
        else:
            cx = (jnp.where(w_iota == x0, wx0, 0.0)
                  + jnp.where(w_iota == x1, wx1, 0.0))          # (W, TP) f32
            tmp = jnp.dot(src_nb.astype(jnp.float32), cx,
                          preferred_element_type=jnp.float32)   # (C*h_pad, TP)

        # Stage B: broadcast-weight by ry (h_pad % 8 == 0 keeps the reshapes
        # layout-free) and segment-sum over H on the MXU instead of a middle-axis
        # VPU/XLU reduce -- only the (C, TP) result stays live.
        prod = (tmp.reshape(c, h_pad, tp) * ry[None, :, :]).reshape(c * h_pad, tp)
        out_nb = jnp.dot(seg, prod, preferred_element_type=jnp.float32)   # (C, TP)
        out_ref[nb] = out_nb.astype(out_ref.dtype)


# ---------------------------------------------------------------------------
# Wrapper-side planning
# ---------------------------------------------------------------------------

def _round_up(x, m):
    return -(-x // m) * m


def _vmem_capacity_bytes():
    cap = 128 << 20
    try:
        info = pltpu.get_tpu_info()
        cap = int(getattr(info, "vmem_capacity_bytes", cap) or cap)
    except Exception:
        pass
    return cap


def _pick_batch_block(n, per_batch_src_bytes, cap_bytes, cap_nb=8):
    best = 1
    for d in range(1, n + 1):
        if n % d == 0 and d <= cap_nb and d * per_batch_src_bytes <= cap_bytes:
            best = d
    return best


def _pick_tile_p(p, step_bytes, budget_bytes, max_tile=8192):
    # TODO(synk): ragged last tile; an un-tileable P currently falls back to one tile.
    if p % 128 != 0:
        return p
    best = 128
    t = 128
    while t <= min(p, max_tile):
        if p % t == 0 and step_bytes(t) <= budget_bytes:
            best = t
        t += 128
    return best


@functools.partial(jax.jit, static_argnames=("tile_p", "batch_block"))
def spatial_transformer_2d(src, flow, tile_p=None, batch_block=None):
    """Forward pass of SpatialTransformer2D (NCHW; flow[:,0]=row, flow[:,1]=col)."""
    n, c, h, w = src.shape
    assert flow.shape == (n, 2, h, w), flow.shape
    # TODO(synk): H == 1 or W == 1 divides by zero in the module's own (S-1)
    # normalization; not supported here either.
    assert h > 1 and w > 1
    p = h * w
    h_pad = _round_up(h, 8)
    sy = float(h) / float(h - 1)
    sx = float(w) / float(w - 1)
    itemsize = jnp.dtype(src.dtype).itemsize

    vmem_cap = _vmem_capacity_bytes()
    budget = min(16 << 20, vmem_cap // 8)      # per-step working-set target

    use_combined = p <= 1024                   # dense (H*W, TILE_P) one-hot is cheap
    per_batch_src = (c * p if use_combined else c * h_pad * w) * itemsize

    if batch_block is None:
        nb = _pick_batch_block(n, per_batch_src, cap_bytes=budget // 4)
    else:
        nb = int(batch_block)
        assert nb >= 1 and n % nb == 0

    if use_combined:
        def step_bytes(t):
            io = 2 * (nb * 2 * t + 2 * t + nb * c * t) * 4
            s = 2 * nb * per_batch_src
            inter = (2 * p * t + 2 * c * t + 24 * t) * 4
            return io + s + inter
    else:
        def step_bytes(t):
            io = 2 * (nb * 2 * t + 2 * t + nb * c * t) * 4
            s = 2 * nb * per_batch_src
            inter = (2 * c * h_pad * t + 3 * h_pad * t + 3 * w * t + 16 * t) * 4
            return io + s + inter

    if tile_p is None:
        tp = _pick_tile_p(p, step_bytes, budget)
    else:
        tp = int(tile_p)
        assert p % tp == 0 and (tp % 128 == 0 or tp == p)

    vmem_limit = int(min(int(vmem_cap * 0.75),
                         max(32 << 20, 2 * step_bytes(tp))))

    # Base grid (2, P): row/col index pre-scaled by S/(S-1) and shifted by -0.5, so
    # the kernel never does an integer //W or %W per pixel.
    rows = jnp.arange(h, dtype=jnp.float32) * sy - 0.5
    cols = jnp.arange(w, dtype=jnp.float32) * sx - 0.5
    base = jnp.stack([
        jnp.broadcast_to(rows[:, None], (h, w)).reshape(p),
        jnp.broadcast_to(cols[None, :], (h, w)).reshape(p),
    ], axis=0)                                                  # (2, P) f32

    flow_v = flow.reshape(n, 2, p)

    if use_combined:
        src_v = src.reshape(n, c, p)
        src_block = (nb, c, p)
        kernel = functools.partial(_combined_kernel, nb_block=nb,
                                   h=h, w=w, sy=sy, sx=sx)
    else:
        src_p = src if h_pad == h else jnp.pad(
            src, ((0, 0), (0, 0), (0, h_pad - h), (0, 0)))
        src_v = src_p.reshape(n, c * h_pad, w)
        src_block = (nb, c * h_pad, w)
        kernel = functools.partial(
            _separable_kernel, nb_block=nb, c=c, h=h, w=w, h_pad=h_pad,
            sy=sy, sx=sx, exact_onehot=bool(src.dtype == jnp.bfloat16))

    out = pl.pallas_call(
        kernel,
        out_shape=jax.ShapeDtypeStruct((n, c, p), src.dtype),
        grid_spec=pltpu.PrefetchScalarGridSpec(
            num_scalar_prefetch=0,
            # p innermost: the src block index is unchanged across p, so Pallas
            # fetches it once per batch block instead of once per pixel tile.
            grid=(n // nb, p // tp),
            in_specs=[
                pl.BlockSpec((2, tp), lambda b, pt: (0, pt)),          # base grid
                pl.BlockSpec((nb, 2, tp), lambda b, pt: (b, 0, pt)),   # flow
                pl.BlockSpec(src_block, lambda b, pt: (b, 0, 0)),      # src
            ],
            out_specs=pl.BlockSpec((nb, c, tp), lambda b, pt: (b, 0, pt)),
        ),
        compiler_params=pltpu.CompilerParams(
            dimension_semantics=("parallel", "parallel"),
            vmem_limit_bytes=vmem_limit),
    )(base, flow_v, src_v)
    return out.reshape(n, c, h, w)


# ---------------------------------------------------------------------------
# Pure-JAX reference (same semantics as the torch module)
# ---------------------------------------------------------------------------

def _reference(src, flow):
    n, c, h, w = src.shape
    row = jnp.arange(h, dtype=jnp.float32)[:, None]
    col = jnp.arange(w, dtype=jnp.float32)[None, :]
    y = row + flow[:, 0].astype(jnp.float32)
    x = col + flow[:, 1].astype(jnp.float32)
    ypix = ((2.0 * (y / (h - 1) - 0.5) + 1.0) * h - 1.0) * 0.5
    xpix = ((2.0 * (x / (w - 1) - 0.5) + 1.0) * w - 1.0) * 0.5
    y0 = jnp.floor(ypix)
    x0 = jnp.floor(xpix)
    wy1 = ypix - y0
    wx1 = xpix - x0
    out = jnp.zeros((n, c, h, w), jnp.float32)
    srcf = src.astype(jnp.float32)
    for dy, wy in ((0, 1.0 - wy1), (1, wy1)):
        for dx, wx in ((0, 1.0 - wx1), (1, wx1)):
            yi = y0 + dy
            xi = x0 + dx
            valid = (yi >= 0) & (yi < h) & (xi >= 0) & (xi < w)
            yc = jnp.clip(yi, 0, h - 1).astype(jnp.int32)
            xc = jnp.clip(xi, 0, w - 1).astype(jnp.int32)
            vals = srcf[jnp.arange(n)[:, None, None, None],
                        jnp.arange(c)[None, :, None, None],
                        yc[:, None], xc[:, None]]
            out = out + (wy * wx * valid.astype(jnp.float32))[:, None] * vals
    return out


if __name__ == "__main__":
    key = jax.random.PRNGKey(0)
    ks = jax.random.split(key, 4)

    # Case 1: small image -> combined single-matmul path (single grid step,
    # NB=2 batch elements folded into it).
    N, C, H, W = 2, 4, 16, 16
    src1 = jax.random.normal(ks[0], (N, C, H, W), dtype=jnp.float32)
    flow1 = 2.5 * jax.random.normal(ks[1], (N, 2, H, W), dtype=jnp.float32)
    out1 = jax.block_until_ready(spatial_transformer_2d(src1, flow1))
    ref1 = _reference(src1, flow1)
    assert out1.shape == (N, C, H, W)
    assert jnp.allclose(out1, ref1, atol=1e-4, rtol=1e-4), "case 1 mismatch"

    # Case 2: larger image, H not a multiple of 8 -> separable path with H padding,
    # 4 pixel tiles per batch block (exercises the tiled grid + src reuse).
    N2, C2, H2, W2 = 2, 3, 20, 128
    src2 = jax.random.normal(ks[2], (N2, C2, H2, W2), dtype=jnp.float32)
    flow2 = 3.0 * jax.random.normal(ks[3], (N2, 2, H2, W2), dtype=jnp.float32)
    out2 = jax.block_until_ready(spatial_transformer_2d(src2, flow2, tile_p=640))
    ref2 = _reference(src2, flow2)
    assert out2.shape == (N2, C2, H2, W2)
    assert jnp.allclose(out2, ref2, atol=1e-4, rtol=1e-4), "case 2 mismatch"

    # Case 3: bf16 inputs -> exact 0/1 one-hot two-matmul Stage A (bf16 MXU rate,
    # f32 bilinear weights); only the final bf16 output cast loses precision.
    src3 = src2.astype(jnp.bfloat16)
    flow3 = flow2.astype(jnp.bfloat16)
    out3 = jax.block_until_ready(spatial_transformer_2d(src3, flow3, tile_p=640))
    ref3 = _reference(src3, flow3)
    assert out3.dtype == jnp.bfloat16
    assert jnp.allclose(out3.astype(jnp.float32), ref3,
                        atol=2e-2, rtol=2e-2), "case 3 mismatch"

    print("KERNEL_OK")
</pallas_src>

<mosaic_0001>
module attributes {stable_mosaic.version = 11 : i64} {
  func.func @_combined_kernel(%arg0: i32, %arg1: i32, %arg2: memref<2x256xf32, #tpu.memory_space<vmem>>, %arg3: memref<2x2x256xf32, #tpu.memory_space<vmem>>, %arg4: memref<2x4x256xf32, #tpu.memory_space<vmem>>, %arg5: memref<2x4x256xf32, #tpu.memory_space<vmem>>) attributes {dimension_semantics = [#tpu.dimension_semantics<parallel>, #tpu.dimension_semantics<parallel>], iteration_bounds = array<i64: 1, 1>, scalar_prefetch = 0 : i64, scratch_operands = 0 : i64, tpu.core_type = #tpu.core_type<tc>, window_params = [{transform_indices = @transform_0, window_bounds = array<i64: 2, 256>}, {transform_indices = @transform_1, window_bounds = array<i64: 2, 2, 256>}, {transform_indices = @transform_2, window_bounds = array<i64: 2, 4, 256>}, {transform_indices = @transform_3, window_bounds = array<i64: 2, 4, 256>}]} {
    %c0 = arith.constant 0 : index
    %c0_0 = arith.constant 0 : index
    %0 = vector.load %arg2[%c0, %c0_0] : memref<2x256xf32, #tpu.memory_space<vmem>>, vector<2x256xf32>
    %1 = tpu.iota {dimensions = array<i32: 0>} : vector<256x256xi32>
    %c0_1 = arith.constant 0 : index
    %c0_2 = arith.constant 0 : index
    %c0_3 = arith.constant 0 : index
    %2 = vector.load %arg3[%c0_1, %c0_2, %c0_3] : memref<2x2x256xf32, #tpu.memory_space<vmem>>, vector<1x2x256xf32>
    %3 = vector.shape_cast %2 : vector<1x2x256xf32> to vector<2x256xf32>
    %4 = vector.extract_strided_slice %0 {offsets = [0, 0], sizes = [1, 256], strides = [1, 1]} : vector<2x256xf32> to vector<1x256xf32>
    %5 = vector.extract_strided_slice %3 {offsets = [0, 0], sizes = [1, 256], strides = [1, 1]} : vector<2x256xf32> to vector<1x256xf32>
    %cst = arith.constant 1.06666672 : f32
    %6 = vector.broadcast %cst : f32 to vector<1x256xf32>
    %7 = arith.mulf %5, %6 : vector<1x256xf32>
    %8 = arith.addf %4, %7 : vector<1x256xf32>
    %9 = vector.extract_strided_slice %0 {offsets = [1, 0], sizes = [1, 256], strides = [1, 1]} : vector<2x256xf32> to vector<1x256xf32>
    %10 = vector.extract_strided_slice %3 {offsets = [1, 0], sizes = [1, 256], strides = [1, 1]} : vector<2x256xf32> to vector<1x256xf32>
    %cst_4 = arith.constant 1.06666672 : f32
    %11 = vector.broadcast %cst_4 : f32 to vector<1x256xf32>
    %12 = arith.mulf %10, %11 : vector<1x256xf32>
    %13 = arith.addf %9, %12 : vector<1x256xf32>
    %14 = math.floor %8 : vector<1x256xf32>
    %15 = math.floor %13 : vector<1x256xf32>
    %16 = arith.subf %8, %14 : vector<1x256xf32>
    %17 = arith.subf %13, %15 : vector<1x256xf32>
    %cst_5 = arith.constant 1.000000e+00 : f32
    %18 = vector.broadcast %cst_5 : f32 to vector<1x256xf32>
    %19 = arith.subf %18, %16 : vector<1x256xf32>
    %cst_6 = arith.constant 1.000000e+00 : f32
    %20 = vector.broadcast %cst_6 : f32 to vector<1x256xf32>
    %21 = arith.subf %20, %17 : vector<1x256xf32>
    %cst_7 = arith.constant 0.000000e+00 : f32
    %22 = vector.broadcast %cst_7 : f32 to vector<1x256xf32>
    %23 = arith.cmpf oge, %14, %22 : vector<1x256xf32>
    %cst_8 = arith.constant 1.500000e+01 : f32
    %24 = vector.broadcast %cst_8 : f32 to vector<1x256xf32>
    %25 = arith.cmpf ole, %14, %24 : vector<1x256xf32>
    %26 = arith.andi %23, %25 : vector<1x256xi1>
    %27 = arith.extui %26 : vector<1x256xi1> to vector<1x256xi32>
    %28 = arith.sitofp %27 : vector<1x256xi32> to vector<1x256xf32>
    %cst_9 = arith.constant -1.000000e+00 : f32
    %29 = vector.broadcast %cst_9 : f32 to vector<1x256xf32>
    %30 = arith.cmpf oge, %14, %29 : vector<1x256xf32>
    %cst_10 = arith.constant 1.400000e+01 : f32
    %31 = vector.broadcast %cst_10 : f32 to vector<1x256xf32>
    %32 = arith.cmpf ole, %14, %31 : vector<1x256xf32>
    %33 = arith.andi %30, %32 : vector<1x256xi1>
    %34 = arith.extui %33 : vector<1x256xi1> to vector<1x256xi32>
    %35 = arith.sitofp %34 : vector<1x256xi32> to vector<1x256xf32>
    %cst_11 = arith.constant 0.000000e+00 : f32
    %36 = vector.broadcast %cst_11 : f32 to vector<1x256xf32>
    %37 = arith.cmpf oge, %15, %36 : vector<1x256xf32>
    %cst_12 = arith.constant 1.500000e+01 : f32
    %38 = vector.broadcast %cst_12 : f32 to vector<1x256xf32>
    %39 = arith.cmpf ole, %15, %38 : vector<1x256xf32>
    %40 = arith.andi %37, %39 : vector<1x256xi1>
    %41 = arith.extui %40 : vector<1x256xi1> to vector<1x256xi32>
    %42 = arith.sitofp %41 : vector<1x256xi32> to vector<1x256xf32>
    %cst_13 = arith.constant -1.000000e+00 : f32
    %43 = vector.broadcast %cst_13 : f32 to vector<1x256xf32>
    %44 = arith.cmpf oge, %15, %43 : vector<1x256xf32>
    %cst_14 = arith.constant 1.400000e+01 : f32
    %45 = vector.broadcast %cst_14 : f32 to vector<1x256xf32>
    %46 = arith.cmpf ole, %15, %45 : vector<1x256xf32>
    %47 = arith.andi %44, %46 : vector<1x256xi1>
    %48 = arith.extui %47 : vector<1x256xi1> to vector<1x256xi32>
    %49 = arith.sitofp %48 : vector<1x256xi32> to vector<1x256xf32>
    %cst_15 = arith.constant 0.000000e+00 : f32
    %cst_16 = arith.constant 1.500000e+01 : f32
    %50 = vector.broadcast %cst_15 : f32 to vector<1x256xf32>
    %51 = arith.maximumf %50, %14 : vector<1x256xf32>
    %52 = vector.broadcast %cst_16 : f32 to vector<1x256xf32>
    %53 = arith.minimumf %52, %51 : vector<1x256xf32>
    %54 = arith.fptosi %53 : vector<1x256xf32> to vector<1x256xi32>
    %cst_17 = arith.constant 1.000000e+00 : f32
    %55 = vector.broadcast %cst_17 : f32 to vector<1x256xf32>
    %56 = arith.addf %14, %55 : vector<1x256xf32>
    %cst_18 = arith.constant 0.000000e+00 : f32
    %cst_19 = arith.constant 1.500000e+01 : f32
    %57 = vector.broadcast %cst_18 : f32 to vector<1x256xf32>
    %58 = arith.maximumf %57, %56 : vector<1x256xf32>
    %59 = vector.broadcast %cst_19 : f32 to vector<1x256xf32>
    %60 = arith.minimumf %59, %58 : vector<1x256xf32>
    %61 = arith.fptosi %60 : vector<1x256xf32> to vector<1x256xi32>
    %cst_20 = arith.constant 0.000000e+00 : f32
    %cst_21 = arith.constant 1.500000e+01 : f32
    %62 = vector.broadcast %cst_20 : f32 to vector<1x256xf32>
    %63 = arith.maximumf %62, %15 : vector<1x256xf32>
    %64 = vector.broadcast %cst_21 : f32 to vector<1x256xf32>
    %65 = arith.minimumf %64, %63 : vector<1x256xf32>
    %66 = arith.fptosi %65 : vector<1x256xf32> to vector<1x256xi32>
    %cst_22 = arith.constant 1.000000e+00 : f32
    %67 = vector.broadcast %cst_22 : f32 to vector<1x256xf32>
    %68 = arith.addf %15, %67 : vector<1x256xf32>
    %cst_23 = arith.constant 0.000000e+00 : f32
    %cst_24 = arith.constant 1.500000e+01 : f32
    %69 = vector.broadcast %cst_23 : f32 to vector<1x256xf32>
    %70 = arith.maximumf %69, %68 : vector<1x256xf32>
    %71 = vector.broadcast %cst_24 : f32 to vector<1x256xf32>
    %72 = arith.minimumf %71, %70 : vector<1x256xf32>
    %73 = arith.fptosi %72 : vector<1x256xf32> to vector<1x256xi32>
    %74 = arith.mulf %19, %21 : vector<1x256xf32>
    %75 = arith.mulf %74, %28 : vector<1x256xf32>
    %76 = arith.mulf %75, %42 : vector<1x256xf32>
    %77 = arith.mulf %19, %17 : vector<1x256xf32>
    %78 = arith.mulf %77, %28 : vector<1x256xf32>
    %79 = arith.mulf %78, %49 : vector<1x256xf32>
    %80 = arith.mulf %16, %21 : vector<1x256xf32>
    %81 = arith.mulf %80, %35 : vector<1x256xf32>
    %82 = arith.mulf %81, %42 : vector<1x256xf32>
    %83 = arith.mulf %16, %17 : vector<1x256xf32>
    %84 = arith.mulf %83, %35 : vector<1x256xf32>
    %85 = arith.mulf %84, %49 : vector<1x256xf32>
    %c16_i32 = arith.constant 16 : i32
    %86 = vector.broadcast %c16_i32 : i32 to vector<1x256xi32>
    %87 = arith.muli %54, %86 : vector<1x256xi32>
    %88 = arith.addi %87, %66 : vector<1x256xi32>
    %c16_i32_25 = arith.constant 16 : i32
    %89 = vector.broadcast %c16_i32_25 : i32 to vector<1x256xi32>
    %90 = arith.muli %54, %89 : vector<1x256xi32>
    %91 = arith.addi %90, %73 : vector<1x256xi32>
    %c16_i32_26 = arith.constant 16 : i32
    %92 = vector.broadcast %c16_i32_26 : i32 to vector<1x256xi32>
    %93 = arith.muli %61, %92 : vector<1x256xi32>
    %94 = arith.addi %93, %66 : vector<1x256xi32>
    %c16_i32_27 = arith.constant 16 : i32
    %95 = vector.broadcast %c16_i32_27 : i32 to vector<1x256xi32>
    %96 = arith.muli %61, %95 : vector<1x256xi32>
    %97 = arith.addi %96, %73 : vector<1x256xi32>
    %98 = vector.broadcast %88 : vector<1x256xi32> to vector<256x256xi32>
    %99 = arith.cmpi eq, %1, %98 : vector<256x256xi32>
    %cst_28 = arith.constant 0.000000e+00 : f32
    %100 = vector.shape_cast %76 : vector<1x256xf32> to vector<1x256xf32>
    %101 = vector.broadcast %100 : vector<1x256xf32> to vector<256x256xf32>
    %102 = vector.broadcast %cst_28 : f32 to vector<256x256xf32>
    %103 = arith.select %99, %101, %102 : vector<256x256xi1>, vector<256x256xf32>
    %104 = vector.broadcast %91 : vector<1x256xi32> to vector<256x256xi32>
    %105 = arith.cmpi eq, %1, %104 : vector<256x256xi32>
    %cst_29 = arith.constant 0.000000e+00 : f32
    %106 = vector.shape_cast %79 : vector<1x256xf32> to vector<1x256xf32>
    %107 = vector.broadcast %106 : vector<1x256xf32> to vector<256x256xf32>
    %108 = vector.broadcast %cst_29 : f32 to vector<256x256xf32>
    %109 = arith.select %105, %107, %108 : vector<256x256xi1>, vector<256x256xf32>
    %110 = arith.addf %103, %109 : vector<256x256xf32>
    %111 = vector.broadcast %94 : vector<1x256xi32> to vector<256x256xi32>
    %112 = arith.cmpi eq, %1, %111 : vector<256x256xi32>
    %cst_30 = arith.constant 0.000000e+00 : f32
    %113 = vector.shape_cast %82 : vector<1x256xf32> to vector<1x256xf32>
    %114 = vector.broadcast %113 : vector<1x256xf32> to vector<256x256xf32>
    %115 = vector.broadcast %cst_30 : f32 to vector<256x256xf32>
    %116 = arith.select %112, %114, %115 : vector<256x256xi1>, vector<256x256xf32>
    %117 = arith.addf %110, %116 : vector<256x256xf32>
    %118 = vector.broadcast %97 : vector<1x256xi32> to vector<256x256xi32>
    %119 = arith.cmpi eq, %1, %118 : vector<256x256xi32>
    %cst_31 = arith.constant 0.000000e+00 : f32
    %120 = vector.shape_cast %85 : vector<1x256xf32> to vector<1x256xf32>
    %121 = vector.broadcast %120 : vector<1x256xf32> to vector<256x256xf32>
    %122 = vector.broadcast %cst_31 : f32 to vector<256x256xf32>
    %123 = arith.select %119, %121, %122 : vector<256x256xi1>, vector<256x256xf32>
    %124 = arith.addf %117, %123 : vector<256x256xf32>
    %c0_32 = arith.constant 0 : index
    %c0_33 = arith.constant 0 : index
    %c0_34 = arith.constant 0 : index
    %125 = vector.load %arg4[%c0_32, %c0_33, %c0_34] : memref<2x4x256xf32, #tpu.memory_space<vmem>>, vector<1x4x256xf32>
    %126 = vector.shape_cast %125 : vector<1x4x256xf32> to vector<4x256xf32>
    %cst_35 = arith.constant dense<0.000000e+00> : vector<4x256xf32>
    %127 = tpu.matmul %126, %124, %cst_35 {dimension_numbers = #tpu.dot_dimension_numbers<[1], [0], [0], [1], [0, 0, 1, 1], [], []>} : vector<4x256xf32>, vector<256x256xf32>, vector<4x256xf32> -> vector<4x256xf32>
    %c0_36 = arith.constant 0 : index
    %c0_37 = arith.constant 0 : index
    %c0_38 = arith.constant 0 : index
    %128 = vector.load %arg5[%c0_36, %c0_37, %c0_38] : memref<2x4x256xf32, #tpu.memory_space<vmem>>, vector<1x4x256xf32>
    %129 = vector.shape_cast %128 : vector<1x4x256xf32> to vector<4x256xf32>
    %130 = vector.shape_cast %127 : vector<4x256xf32> to vector<1x4x256xf32>
    tpu.vector_store %arg5[%c0_36, %c0_37, %c0_38], %130 {strides = array<i32>} : memref<2x4x256xf32, #tpu.memory_space<vmem>>, vector<1x4x256xf32>,
    %c1 = arith.constant 1 : index
    %c0_39 = arith.constant 0 : index
    %c0_40 = arith.constant 0 : index
    %131 = vector.load %arg3[%c1, %c0_39, %c0_40] : memref<2x2x256xf32, #tpu.memory_space<vmem>>, vector<1x2x256xf32>
    %132 = vector.shape_cast %131 : vector<1x2x256xf32> to vector<2x256xf32>
    %133 = vector.extract_strided_slice %0 {offsets = [0, 0], sizes = [1, 256], strides = [1, 1]} : vector<2x256xf32> to vector<1x256xf32>
    %134 = vector.extract_strided_slice %132 {offsets = [0, 0], sizes = [1, 256], strides = [1, 1]} : vector<2x256xf32> to vector<1x256xf32>
    %cst_41 = arith.constant 1.06666672 : f32
    %135 = vector.broadcast %cst_41 : f32 to vector<1x256xf32>
    %136 = arith.mulf %134, %135 : vector<1x256xf32>
    %137 = arith.addf %133, %136 : vector<1x256xf32>
    %138 = vector.extract_strided_slice %0 {offsets = [1, 0], sizes = [1, 256], strides = [1, 1]} : vector<2x256xf32> to vector<1x256xf32>
    %139 = vector.extract_strided_slice %132 {offsets = [1, 0], sizes = [1, 256], strides = [1, 1]} : vector<2x256xf32> to vector<1x256xf32>
    %cst_42 = arith.constant 1.06666672 : f32
    %140 = vector.broadcast %cst_42 : f32 to vector<1x256xf32>
    %141 = arith.mulf %139, %140 : vector<1x256xf32>
    %142 = arith.addf %138, %141 : vector<1x256xf32>
    %143 = math.floor %137 : vector<1x256xf32>
    %144 = math.floor %142 : vector<1x256xf32>
    %145 = arith.subf %137, %143 : vector<1x256xf32>
    %146 = arith.subf %142, %144 : vector<1x256xf32>
    %cst_43 = arith.constant 1.000000e+00 : f32
    %147 = vector.broadcast %cst_43 : f32 to vector<1x256xf32>
    %148 = arith.subf %147, %145 : vector<1x256xf32>
    %cst_44 = arith.constant 1.000000e+00 : f32
    %149 = vector.broadcast %cst_44 : f32 to vector<1x256xf32>
    %150 = arith.subf %149, %146 : vector<1x256xf32>
    %cst_45 = arith.constant 0.000000e+00 : f32
    %151 = vector.broadcast %cst_45 : f32 to vector<1x256xf32>
    %152 = arith.cmpf oge, %143, %151 : vector<1x256xf32>
    %cst_46 = arith.constant 1.500000e+01 : f32
    %153 = vector.broadcast %cst_46 : f32 to vector<1x256xf32>
    %154 = arith.cmpf ole, %143, %153 : vector<1x256xf32>
    %155 = arith.andi %152, %154 : vector<1x256xi1>
    %156 = arith.extui %155 : vector<1x256xi1> to vector<1x256xi32>
    %157 = arith.sitofp %156 : vector<1x256xi32> to vector<1x256xf32>
    %cst_47 = arith.constant -1.000000e+00 : f32
    %158 = vector.broadcast %cst_47 : f32 to vector<1x256xf32>
    %159 = arith.cmpf oge, %143, %158 : vector<1x256xf32>
    %cst_48 = arith.constant 1.400000e+01 : f32
    %160 = vector.broadcast %cst_48 : f32 to vector<1x256xf32>
    %161 = arith.cmpf ole, %143, %160 : vector<1x256xf32>
    %162 = arith.andi %159, %161 : vector<1x256xi1>
    %163 = arith.extui %162 : vector<1x256xi1> to vector<1x256xi32>
    %164 = arith.sitofp %163 : vector<1x256xi32> to vector<1x256xf32>
    %cst_49 = arith.constant 0.000000e+00 : f32
    %165 = vector.broadcast %cst_49 : f32 to vector<1x256xf32>
    %166 = arith.cmpf oge, %144, %165 : vector<1x256xf32>
    %cst_50 = arith.constant 1.500000e+01 : f32
    %167 = vector.broadcast %cst_50 : f32 to vector<1x256xf32>
    %168 = arith.cmpf ole, %144, %167 : vector<1x256xf32>
    %169 = arith.andi %166, %168 : vector<1x256xi1>
    %170 = arith.extui %169 : vector<1x256xi1> to vector<1x256xi32>
    %171 = arith.sitofp %170 : vector<1x256xi32> to vector<1x256xf32>
    %cst_51 = arith.constant -1.000000e+00 : f32
    %172 = vector.broadcast %cst_51 : f32 to vector<1x256xf32>
    %173 = arith.cmpf oge, %144, %172 : vector<1x256xf32>
    %cst_52 = arith.constant 1.400000e+01 : f32
    %174 = vector.broadcast %cst_52 : f32 to vector<1x256xf32>
    %175 = arith.cmpf ole, %144, %174 : vector<1x256xf32>
    %176 = arith.andi %173, %175 : vector<1x256xi1>
    %177 = arith.extui %176 : vector<1x256xi1> to vector<1x256xi32>
    %178 = arith.sitofp %177 : vector<1x256xi32> to vector<1x256xf32>
    %cst_53 = arith.constant 0.000000e+00 : f32
    %cst_54 = arith.constant 1.500000e+01 : f32
    %179 = vector.broadcast %cst_53 : f32 to vector<1x256xf32>
    %180 = arith.maximumf %179, %143 : vector<1x256xf32>
    %181 = vector.broadcast %cst_54 : f32 to vector<1x256xf32>
    %182 = arith.minimumf %181, %180 : vector<1x256xf32>
    %183 = arith.fptosi %182 : vector<1x256xf32> to vector<1x256xi32>
    %cst_55 = arith.constant 1.000000e+00 : f32
    %184 = vector.broadcast %cst_55 : f32 to vector<1x256xf32>
    %185 = arith.addf %143, %184 : vector<1x256xf32>
    %cst_56 = arith.constant 0.000000e+00 : f32
    %cst_57 = arith.constant 1.500000e+01 : f32
    %186 = vector.broadcast %cst_56 : f32 to vector<1x256xf32>
    %187 = arith.maximumf %186, %185 : vector<1x256xf32>
    %188 = vector.broadcast %cst_57 : f32 to vector<1x256xf32>
    %189 = arith.minimumf %188, %187 : vector<1x256xf32>
    %190 = arith.fptosi %189 : vector<1x256xf32> to vector<1x256xi32>
    %cst_58 = arith.constant 0.000000e+00 : f32
    %cst_59 = arith.constant 1.500000e+01 : f32
    %191 = vector.broadcast %cst_58 : f32 to vector<1x256xf32>
    %192 = arith.maximumf %191, %144 : vector<1x256xf32>
    %193 = vector.broadcast %cst_59 : f32 to vector<1x256xf32>
    %194 = arith.minimumf %193, %192 : vector<1x256xf32>
    %195 = arith.fptosi %194 : vector<1x256xf32> to vector<1x256xi32>
    %cst_60 = arith.constant 1.000000e+00 : f32
    %196 = vector.broadcast %cst_60 : f32 to vector<1x256xf32>
    %197 = arith.addf %144, %196 : vector<1x256xf32>
    %cst_61 = arith.constant 0.000000e+00 : f32
    %cst_62 = arith.constant 1.500000e+01 : f32
    %198 = vector.broadcast %cst_61 : f32 to vector<1x256xf32>
    %199 = arith.maximumf %198, %197 : vector<1x256xf32>
    %200 = vector.broadcast %cst_62 : f32 to vector<1x256xf32>
    %201 = arith.minimumf %200, %199 : vector<1x256xf32>
    %202 = arith.fptosi %201 : vector<1x256xf32> to vector<1x256xi32>
    %203 = arith.mulf %148, %150 : vector<1x256xf32>
    %204 = arith.mulf %203, %157 : vector<1x256xf32>
    %205 = arith.mulf %204, %171 : vector<1x256xf32>
    %206 = arith.mulf %148, %146 : vector<1x256xf32>
    %207 = arith.mulf %206, %157 : vector<1x256xf32>
    %208 = arith.mulf %207, %178 : vector<1x256xf32>
    %209 = arith.mulf %145, %150 : vector<1x256xf32>
    %210 = arith.mulf %209, %164 : vector<1x256xf32>
    %211 = arith.mulf %210, %171 : vector<1x256xf32>
    %212 = arith.mulf %145, %146 : vector<1x256xf32>
    %213 = arith.mulf %212, %164 : vector<1x256xf32>
    %214 = arith.mulf %213, %178 : vector<1x256xf32>
    %c16_i32_63 = arith.constant 16 : i32
    %215 = vector.broadcast %c16_i32_63 : i32 to vector<1x256xi32>
    %216 = arith.muli %183, %215 : vector<1x256xi32>
    %217 = arith.addi %216, %195 : vector<1x256xi32>
    %c16_i32_64 = arith.constant 16 : i32
    %218 = vector.broadcast %c16_i32_64 : i32 to vector<1x256xi32>
    %219 = arith.muli %183, %218 : vector<1x256xi32>
    %220 = arith.addi %219, %202 : vector<1x256xi32>
    %c16_i32_65 = arith.constant 16 : i32
    %221 = vector.broadcast %c16_i32_65 : i32 to vector<1x256xi32>
    %222 = arith.muli %190, %221 : vector<1x256xi32>
    %223 = arith.addi %222, %195 : vector<1x256xi32>
    %c16_i32_66 = arith.constant 16 : i32
    %224 = vector.broadcast %c16_i32_66 : i32 to vector<1x256xi32>
    %225 = arith.muli %190, %224 : vector<1x256xi32>
    %226 = arith.addi %225, %202 : vector<1x256xi32>
    %227 = vector.broadcast %217 : vector<1x256xi32> to vector<256x256xi32>
    %228 = arith.cmpi eq, %1, %227 : vector<256x256xi32>
    %cst_67 = arith.constant 0.000000e+00 : f32
    %229 = vector.shape_cast %205 : vector<1x256xf32> to vector<1x256xf32>
    %230 = vector.broadcast %229 : vector<1x256xf32> to vector<256x256xf32>
    %231 = vector.broadcast %cst_67 : f32 to vector<256x256xf32>
    %232 = arith.select %228, %230, %231 : vector<256x256xi1>, vector<256x256xf32>
    %233 = vector.broadcast %220 : vector<1x256xi32> to vector<256x256xi32>
    %234 = arith.cmpi eq, %1, %233 : vector<256x256xi32>
    %cst_68 = arith.constant 0.000000e+00 : f32
    %235 = vector.shape_cast %208 : vector<1x256xf32> to vector<1x256xf32>
    %236 = vector.broadcast %235 : vector<1x256xf32> to vector<256x256xf32>
    %237 = vector.broadcast %cst_68 : f32 to vector<256x256xf32>
    %238 = arith.select %234, %236, %237 : vector<256x256xi1>, vector<256x256xf32>
    %239 = arith.addf %232, %238 : vector<256x256xf32>
    %240 = vector.broadcast %223 : vector<1x256xi32> to vector<256x256xi32>
    %241 = arith.cmpi eq, %1, %240 : vector<256x256xi32>
    %cst_69 = arith.constant 0.000000e+00 : f32
    %242 = vector.shape_cast %211 : vector<1x256xf32> to vector<1x256xf32>
    %243 = vector.broadcast %242 : vector<1x256xf32> to vector<256x256xf32>
    %244 = vector.broadcast %cst_69 : f32 to vector<256x256xf32>
    %245 = arith.select %241, %243, %244 : vector<256x256xi1>, vector<256x256xf32>
    %246 = arith.addf %239, %245 : vector<256x256xf32>
    %247 = vector.broadcast %226 : vector<1x256xi32> to vector<256x256xi32>
    %248 = arith.cmpi eq, %1, %247 : vector<256x256xi32>
    %cst_70 = arith.constant 0.000000e+00 : f32
    %249 = vector.shape_cast %214 : vector<1x256xf32> to vector<1x256xf32>
    %250 = vector.broadcast %249 : vector<1x256xf32> to vector<256x256xf32>
    %251 = vector.broadcast %cst_70 : f32 to vector<256x256xf32>
    %252 = arith.select %248, %250, %251 : vector<256x256xi1>, vector<256x256xf32>
    %253 = arith.addf %246, %252 : vector<256x256xf32>
    %c1_71 = arith.constant 1 : index
    %c0_72 = arith.constant 0 : index
    %c0_73 = arith.constant 0 : index
    %254 = vector.load %arg4[%c1_71, %c0_72, %c0_73] : memref<2x4x256xf32, #tpu.memory_space<vmem>>, vector<1x4x256xf32>
    %255 = vector.shape_cast %254 : vector<1x4x256xf32> to vector<4x256xf32>
    %cst_74 = arith.constant dense<0.000000e+00> : vector<4x256xf32>
    %256 = tpu.matmul %255, %253, %cst_74 {dimension_numbers = #tpu.dot_dimension_numbers<[1], [0], [0], [1], [0, 0, 1, 1], [], []>} : vector<4x256xf32>, vector<256x256xf32>, vector<4x256xf32> -> vector<4x256xf32>
    %c1_75 = arith.constant 1 : index
    %c0_76 = arith.constant 0 : index
    %c0_77 = arith.constant 0 : index
    %257 = vector.load %arg5[%c1_75, %c0_76, %c0_77] : memref<2x4x256xf32, #tpu.memory_space<vmem>>, vector<1x4x256xf32>
    %258 = vector.shape_cast %257 : vector<1x4x256xf32> to vector<4x256xf32>
    %259 = vector.shape_cast %256 : vector<4x256xf32> to vector<1x4x256xf32>
    tpu.vector_store %arg5[%c1_75, %c0_76, %c0_77], %259 {strides = array<i32>} : memref<2x4x256xf32, #tpu.memory_space<vmem>>, vector<1x4x256xf32>,
    return
  }
  func.func @transform_0(%arg0: i32, %arg1: i32) -> (i32, i32) {
    %c0_i32 = arith.constant 0 : i32
    %c0_i32_0 = arith.constant 0 : i32
    return %c0_i32, %arg1 : i32, i32
  }
  func.func @transform_1(%arg0: i32, %arg1: i32) -> (i32, i32, i32) {
    %c0_i32 = arith.constant 0 : i32
    %c0_i32_0 = arith.constant 0 : i32
    return %arg0, %c0_i32, %arg1 : i32, i32, i32
  }
  func.func @transform_2(%arg0: i32, %arg1: i32) -> (i32, i32, i32) {
    %c0_i32 = arith.constant 0 : i32
    %c0_i32_0 = arith.constant 0 : i32
    %c0_i32_1 = arith.constant 0 : i32
    return %arg0, %c0_i32, %c0_i32_0 : i32, i32, i32
  }
  func.func @transform_3(%arg0: i32, %arg1: i32) -> (i32, i32, i32) {
    %c0_i32 = arith.constant 0 : i32
    %c0_i32_0 = arith.constant 0 : i32
    return %arg0, %c0_i32, %arg1 : i32, i32, i32
  }
}

</mosaic_0001>

<llo_original>
// kernel: spatial_transformer_2d.1
$region0: #{spatial_transformer_2d.1}
  #allocation0 [shape = 'u32[]', space=smem, size = 0x4, offset = 0x4, fixed_abs, tag = 'smem constant byte address 0x4 - core index']
  #allocation1 [shape = 'u32[144,128]{1,0:T(1,128)}', space=vmem, size = 0x12000, scoped, tag = 'internal scratch']
  %s0 = inlined_call_operand.vmem [shape: f32[2,256], index: 0, kind: input, shape index: {}]
  %s1 = inlined_call_operand.vmem [shape: f32[2,2,256], index: 1, kind: input, shape index: {}]
  %s2 = inlined_call_operand.vmem [shape: f32[2,4,256], index: 2, kind: input, shape index: {}]
  %s3 = inlined_call_operand.vmem [shape: f32[2,4,256], index: 3, kind: output, shape index: {}]
  %s4 = sld [smem:[#allocation0]]
  $region22: #{spatial_transformer_2d.1} parent=0
    _
  %s6 = ssub.s32 1, %s4
  %s7 = scalar_select 0, %s6, %s4
  // Predicated region
  $region2: #{spatial_transformer_2d.1} parent=0 // pred_check
    _
  $region3: #{spatial_transformer_2d.1} parent=0 // pred_check_branch
    %9 = sbr.rel (0) target = $region5
  $region4: #{spatial_transformer_2d.1} parent=0 // pred_region
    _
  $region5: #{spatial_transformer_2d.1} parent=0 // pred_fallthru
    _
  // Predicated region
  $region6: #{spatial_transformer_2d.1} parent=0 // pred_check
    _
  $region7: #{spatial_transformer_2d.1} parent=0 // pred_check_branch
    %11 = sbr.rel (0) target = $region9
  $region8: #{spatial_transformer_2d.1} parent=0 // pred_region
    _
  $region9: #{spatial_transformer_2d.1} parent=0 // pred_fallthru
    _
  // Predicated region
  $region10: #{spatial_transformer_2d.1} parent=0 // pred_check
    _
  $region11: #{spatial_transformer_2d.1} parent=0 // pred_check_branch
    %13 = sbr.rel (0) target = $region13
  $region12: #{spatial_transformer_2d.1} parent=0 // pred_region
    _
  $region13: #{spatial_transformer_2d.1} parent=0 // pred_fallthru
    _
  %v14 = vld [vmem:[%s0] sm:$0xf]
  %v15 = vlaneseq
  %v16 = vshrl.u32 %v15, 7
  %v17 = vadd.s32 %v16, 8
  %v18 = vadd.s32 %v16, 16
  %v19 = vadd.s32 %v16, 24
  %v20 = vadd.s32 %v16, 32
  %v21 = vadd.s32 %v16, 40
  %v22 = vadd.s32 %v16, 48
  %v23 = vadd.s32 %v16, 56
  %v24 = vadd.s32 %v16, 64
  %v25 = vadd.s32 %v16, 72
  %v26 = vadd.s32 %v16, 80
  %v27 = vadd.s32 %v16, 88
  %v28 = vadd.s32 %v16, 96
  %v29 = vadd.s32 %v16, 104
  %v30 = vadd.s32 %v16, 112
  %v31 = vadd.s32 %v16, 120
  %v32 = vadd.s32 %v16, 128
  %v33 = vadd.s32 %v16, 136
  %v34 = vadd.s32 %v16, 144
  %v35 = vadd.s32 %v16, 152
  %v36 = vadd.s32 %v16, 160
  %v37 = vadd.s32 %v16, 168
  %v38 = vadd.s32 %v16, 176
  %v39 = vadd.s32 %v16, 184
  %v40 = vadd.s32 %v16, 192
  %v41 = vadd.s32 %v16, 200
  %v42 = vadd.s32 %v16, 208
  %v43 = vadd.s32 %v16, 216
  %v44 = vadd.s32 %v16, 224
  %v45 = vadd.s32 %v16, 232
  %v46 = vadd.s32 %v16, 240
  %v47 = vadd.s32 %v16, 248
  %v48 = vld [vmem:[%s1] sm:$0xf]
  %v49 = vmul.f32 %v48, 1.0666667
  %v50 = vadd.f32 %v14, %v49
  %v51 = vfloor.f32 %v50
  %v52 = vsub.f32 %v50, %v51
  %v53 = vsub.f32 1.0, %v52
  %vm54 = vcmp.ge.f32.partialorder %v51, 0.0
  %vm55 = vcmp.le.f32.partialorder %v51, 15.0
  %vm56 = vmand %vm54, %vm55
  %v57 = vsel %vm56, 1, 0
  %v58 = vcvt.s32.f32 %v57
  %vm59 = vcmp.ge.f32.partialorder %v51, -1.0
  %vm60 = vcmp.le.f32.partialorder %v51, 14.0
  %vm61 = vmand %vm59, %vm60
  %v62 = vsel %vm61, 1, 0
  %v63 = vcvt.s32.f32 %v62
  %v64 = vmax.f32 %v51, 0.0
  %v65 = vmin.f32 %v64, 15.0
  %v66 = vcvt.f32.s32.to.zero.pseudo %v65
  %v67 = vadd.f32 %v51, 1.0
  %v68 = vmax.f32 %v67, 0.0
  %v69 = vmin.f32 %v68, 15.0
  %v70 = vcvt.f32.s32.to.zero.pseudo %v69
  %v72 = vrot.slane %v53, 7
  %v73 = vrot.slane %v72, 2
  %v75 = vmul.f32 %v53, %v73
  %v76 = vmul.f32 %v75, %v58
  %v78 = vrot.slane %v58, 7
  %v79 = vrot.slane %v78, 2
  %v81 = vmul.f32 %v76, %v79
  %v83 = vrot.slane %v52, 7
  %v84 = vrot.slane %v83, 2
  %v86 = vmul.f32 %v53, %v84
  %v87 = vmul.f32 %v86, %v58
  %v89 = vrot.slane %v63, 7
  %v90 = vrot.slane %v89, 2
  %v92 = vmul.f32 %v87, %v90
  %v93 = vmul.f32 %v52, %v73
  %v94 = vmul.f32 %v93, %v63
  %v95 = vmul.f32 %v94, %v79
  %v96 = vmul.f32 %v52, %v84
  %v97 = vmul.f32 %v96, %v63
  %v98 = vmul.f32 %v97, %v90
  %v99 = vmul.u32 %v66, 16
  %v100 = vrot.slane %v66, 7
  %v101 = vrot.slane %v100, 2
  %v102 = vadd.s32 %v99, %v101
  %v103 = vrot.slane %v70, 7
  %v104 = vrot.slane %v103, 2
  %v105 = vadd.s32 %v99, %v104
  %v106 = vmul.u32 %v70, 16
  %v107 = vadd.s32 %v106, %v101
  %v108 = vadd.s32 %v106, %v104
  %v109 = vlaneseq
  %v110 = vshrl.u32 %v109, 7
  %v111 = vsub.s32 0, %v110
  %v112 = vrot.slane %v102, %v111
  %v113 = vlaneseq
  %v114 = vshrl.u32 %v113, 7
  %v115 = vsub.s32 2, %v114
  %v116 = vrot.slane %v102, %v115
  %v117 = vlaneseq
  %v118 = vshrl.u32 %v117, 7
  %v119 = vsub.s32 0, %v118
  %v120 = vrot.slane %v112, %v119
  %v121 = vlaneseq
  %v122 = vshrl.u32 %v121, 7
  %v123 = vsub.s32 0, %v122
  %v124 = vrot.slane %v116, %v123
  %vm125 = vcmp.eq.s32.totalorder %v16, %v120
  %vm126 = vcmp.eq.s32.totalorder %v16, %v124
  %vm127 = vcmp.eq.s32.totalorder %v17, %v120
  %vm128 = vcmp.eq.s32.totalorder %v17, %v124
  %vm129 = vcmp.eq.s32.totalorder %v18, %v120
  %vm130 = vcmp.eq.s32.totalorder %v18, %v124
  %vm131 = vcmp.eq.s32.totalorder %v19, %v120
  %vm132 = vcmp.eq.s32.totalorder %v19, %v124
  %vm133 = vcmp.eq.s32.totalorder %v20, %v120
  %vm134 = vcmp.eq.s32.totalorder %v20, %v124
  %vm135 = vcmp.eq.s32.totalorder %v21, %v120
  %vm136 = vcmp.eq.s32.totalorder %v21, %v124
  %vm137 = vcmp.eq.s32.totalorder %v22, %v120
  %vm138 = vcmp.eq.s32.totalorder %v22, %v124
  %vm139 = vcmp.eq.s32.totalorder %v23, %v120
  %vm140 = vcmp.eq.s32.totalorder %v23, %v124
  %vm141 = vcmp.eq.s32.totalorder %v24, %v120
  %vm142 = vcmp.eq.s32.totalorder %v24, %v124
  %vm143 = vcmp.eq.s32.totalorder %v25, %v120
  %vm144 = vcmp.eq.s32.totalorder %v25, %v124
  %vm145 = vcmp.eq.s32.totalorder %v26, %v120
  %vm146 = vcmp.eq.s32.totalorder %v26, %v124
  %vm147 = vcmp.eq.s32.totalorder %v27, %v120
  %vm148 = vcmp.eq.s32.totalorder %v27, %v124
  %vm149 = vcmp.eq.s32.totalorder %v28, %v120
  %vm150 = vcmp.eq.s32.totalorder %v28, %v124
  %vm151 = vcmp.eq.s32.totalorder %v29, %v120
  %vm152 = vcmp.eq.s32.totalorder %v29, %v124
  %vm153 = vcmp.eq.s32.totalorder %v30, %v120
  %vm154 = vcmp.eq.s32.totalorder %v30, %v124
  %vm155 = vcmp.eq.s32.totalorder %v31, %v120
  %vm156 = vcmp.eq.s32.totalorder %v31, %v124
  %vm157 = vcmp.eq.s32.totalorder %v32, %v120
  %vm158 = vcmp.eq.s32.totalorder %v32, %v124
  %vm159 = vcmp.eq.s32.totalorder %v33, %v120
  %vm160 = vcmp.eq.s32.totalorder %v33, %v124
  %vm161 = vcmp.eq.s32.totalorder %v34, %v120
  %vm162 = vcmp.eq.s32.totalorder %v34, %v124
  %vm163 = vcmp.eq.s32.totalorder %v35, %v120
  %vm164 = vcmp.eq.s32.totalorder %v35, %v124
  %vm165 = vcmp.eq.s32.totalorder %v36, %v120
  %vm166 = vcmp.eq.s32.totalorder %v36, %v124
  %vm167 = vcmp.eq.s32.totalorder %v37, %v120
  %vm168 = vcmp.eq.s32.totalorder %v37, %v124
  %vm169 = vcmp.eq.s32.totalorder %v38, %v120
  %vm170 = vcmp.eq.s32.totalorder %v38, %v124
  %vm171 = vcmp.eq.s32.totalorder %v39, %v120
  %vm172 = vcmp.eq.s32.totalorder %v39, %v124
  %vm173 = vcmp.eq.s32.totalorder %v40, %v120
  %vm174 = vcmp.eq.s32.totalorder %v40, %v124
  %vm175 = vcmp.eq.s32.totalorder %v41, %v120
  %vm176 = vcmp.eq.s32.totalorder %v41, %v124
  %vm177 = vcmp.eq.s32.totalorder %v42, %v120
  %vm178 = vcmp.eq.s32.totalorder %v42, %v124
  %vm179 = vcmp.eq.s32.totalorder %v43, %v120
  %vm180 = vcmp.eq.s32.totalorder %v43, %v124
  %vm181 = vcmp.eq.s32.totalorder %v44, %v120
  %vm182 = vcmp.eq.s32.totalorder %v44, %v124
  %vm183 = vcmp.eq.s32.totalorder %v45, %v120
  %vm184 = vcmp.eq.s32.totalorder %v45, %v124
  %vm185 = vcmp.eq.s32.totalorder %v46, %v120
  %vm186 = vcmp.eq.s32.totalorder %v46, %v124
  %vm187 = vcmp.eq.s32.totalorder %v47, %v120
  %vm188 = vcmp.eq.s32.totalorder %v47, %v124
  %v190 = vlaneseq
  %v191 = vshrl.u32 %v190, 7
  %v192 = vsub.s32 0, %v191
  %v193 = vrot.slane %v81, %v192
  %v194 = vlaneseq
  %v195 = vshrl.u32 %v194, 7
  %v196 = vsub.s32 2, %v195
  %v197 = vrot.slane %v81, %v196
  %v200 = vlaneseq
  %v201 = vshrl.u32 %v200, 7
  %v202 = vsub.s32 0, %v201
  %v203 = vrot.slane %v193, %v202
  %v204 = vlaneseq
  %v205 = vshrl.u32 %v204, 7
  %v206 = vsub.s32 0, %v205
  %v207 = vrot.slane %v197, %v206
  %v208 = vsel %vm125, %v203, 0.0
  %v209 = vsel %vm126, %v207, 0.0
  %v210 = vsel %vm127, %v203, 0.0
  %v211 = vsel %vm128, %v207, 0.0
  %v212 = vsel %vm129, %v203, 0.0
  %v213 = vsel %vm130, %v207, 0.0
  %v214 = vsel %vm131, %v203, 0.0
  %v215 = vsel %vm132, %v207, 0.0
  %v216 = vsel %vm133, %v203, 0.0
  %v217 = vsel %vm134, %v207, 0.0
  %v218 = vsel %vm135, %v203, 0.0
  %v219 = vsel %vm136, %v207, 0.0
  %v220 = vsel %vm137, %v203, 0.0
  %v221 = vsel %vm138, %v207, 0.0
  %v222 = vsel %vm139, %v203, 0.0
  %v223 = vsel %vm140, %v207, 0.0
  %v224 = vsel %vm141, %v203, 0.0
  %v225 = vsel %vm142, %v207, 0.0
  %v226 = vsel %vm143, %v203, 0.0
  %v227 = vsel %vm144, %v207, 0.0
  %v228 = vsel %vm145, %v203, 0.0
  %v229 = vsel %vm146, %v207, 0.0
  %v230 = vsel %vm147, %v203, 0.0
  %v231 = vsel %vm148, %v207, 0.0
  %v232 = vsel %vm149, %v203, 0.0
  %v233 = vsel %vm150, %v207, 0.0
  %v234 = vsel %vm151, %v203, 0.0
  %v235 = vsel %vm152, %v207, 0.0
  %v236 = vsel %vm153, %v203, 0.0
  %v237 = vsel %vm154, %v207, 0.0
  %v238 = vsel %vm155, %v203, 0.0
  %v239 = vsel %vm156, %v207, 0.0
  %v240 = vsel %vm157, %v203, 0.0
  %v241 = vsel %vm158, %v207, 0.0
  %v242 = vsel %vm159, %v203, 0.0
  %v243 = vsel %vm160, %v207, 0.0
  %v244 = vsel %vm161, %v203, 0.0
  %v245 = vsel %vm162, %v207, 0.0
  %v246 = vsel %vm163, %v203, 0.0
  %v247 = vsel %vm164, %v207, 0.0
  %v248 = vsel %vm165, %v203, 0.0
  %v249 = vsel %vm166, %v207, 0.0
  %v250 = vsel %vm167, %v203, 0.0
  %v251 = vsel %vm168, %v207, 0.0
  %v252 = vsel %vm169, %v203, 0.0
  %v253 = vsel %vm170, %v207, 0.0
  %v254 = vsel %vm171, %v203, 0.0
  %v255 = vsel %vm172, %v207, 0.0
  %v256 = vsel %vm173, %v203, 0.0
  %v257 = vsel %vm174, %v207, 0.0
  %v258 = vsel %vm175, %v203, 0.0
  %v259 = vsel %vm176, %v207, 0.0
  %v260 = vsel %vm177, %v203, 0.0
  %v261 = vsel %vm178, %v207, 0.0
  %v262 = vsel %vm179, %v203, 0.0
  %v263 = vsel %vm180, %v207, 0.0
  %v264 = vsel %vm181, %v203, 0.0
  %v265 = vsel %vm182, %v207, 0.0
  %v266 = vsel %vm183, %v203, 0.0
  %v267 = vsel %vm184, %v207, 0.0
  %v268 = vsel %vm185, %v203, 0.0
  %v269 = vsel %vm186, %v207, 0.0
  %v270 = vsel %vm187, %v203, 0.0
  %v271 = vsel %vm188, %v207, 0.0
  %v272 = vlaneseq
  %v273 = vshrl.u32 %v272, 7
  %v274 = vsub.s32 0, %v273
  %v275 = vrot.slane %v105, %v274
  %v276 = vlaneseq
  %v277 = vshrl.u32 %v276, 7
  %v278 = vsub.s32 2, %v277
  %v279 = vrot.slane %v105, %v278
  %v280 = vlaneseq
  %v281 = vshrl.u32 %v280, 7
  %v282 = vsub.s32 0, %v281
  %v283 = vrot.slane %v275, %v282
  %v284 = vlaneseq
  %v285 = vshrl.u32 %v284, 7
  %v286 = vsub.s32 0, %v285
  %v287 = vrot.slane %v279, %v286
  %vm288 = vcmp.eq.s32.totalorder %v16, %v283
  %vm289 = vcmp.eq.s32.totalorder %v16, %v287
  %vm290 = vcmp.eq.s32.totalorder %v17, %v283
  %vm291 = vcmp.eq.s32.totalorder %v17, %v287
  %vm292 = vcmp.eq.s32.totalorder %v18, %v283
  %vm293 = vcmp.eq.s32.totalorder %v18, %v287
  %vm294 = vcmp.eq.s32.totalorder %v19, %v283
  %vm295 = vcmp.eq.s32.totalorder %v19, %v287
  %vm296 = vcmp.eq.s32.totalorder %v20, %v283
  %vm297 = vcmp.eq.s32.totalorder %v20, %v287
  %vm298 = vcmp.eq.s32.totalorder %v21, %v283
  %vm299 = vcmp.eq.s32.totalorder %v21, %v287
  %vm300 = vcmp.eq.s32.totalorder %v22, %v283
  %vm301 = vcmp.eq.s32.totalorder %v22, %v287
  %vm302 = vcmp.eq.s32.totalorder %v23, %v283
  %vm303 = vcmp.eq.s32.totalorder %v23, %v287
  %vm304 = vcmp.eq.s32.totalorder %v24, %v283
  %vm305 = vcmp.eq.s32.totalorder %v24, %v287
  %vm306 = vcmp.eq.s32.totalorder %v25, %v283
  %vm307 = vcmp.eq.s32.totalorder %v25, %v287
  %vm308 = vcmp.eq.s32.totalorder %v26, %v283
  %vm309 = vcmp.eq.s32.totalorder %v26, %v287
  %vm310 = vcmp.eq.s32.totalorder %v27, %v283
  %vm311 = vcmp.eq.s32.totalorder %v27, %v287
  %vm312 = vcmp.eq.s32.totalorder %v28, %v283
  %vm313 = vcmp.eq.s32.totalorder %v28, %v287
  %vm314 = vcmp.eq.s32.totalorder %v29, %v283
  %vm315 = vcmp.eq.s32.totalorder %v29, %v287
  %vm316 = vcmp.eq.s32.totalorder %v30, %v283
  %vm317 = vcmp.eq.s32.totalorder %v30, %v287
  %vm318 = vcmp.eq.s32.totalorder %v31, %v283
  %vm319 = vcmp.eq.s32.totalorder %v31, %v287
  %vm320 = vcmp.eq.s32.totalorder %v32, %v283
  %vm321 = vcmp.eq.s32.totalorder %v32, %v287
  %vm322 = vcmp.eq.s32.totalorder %v33, %v283
  %vm323 = vcmp.eq.s32.totalorder %v33, %v287
  %vm324 = vcmp.eq.s32.totalorder %v34, %v283
  %vm325 = vcmp.eq.s32.totalorder %v34, %v287
  %vm326 = vcmp.eq.s32.totalorder %v35, %v283
  %vm327 = vcmp.eq.s32.totalorder %v35, %v287
  %vm328 = vcmp.eq.s32.totalorder %v36, %v283
  %vm329 = vcmp.eq.s32.totalorder %v36, %v287
  %vm330 = vcmp.eq.s32.totalorder %v37, %v283
  %vm331 = vcmp.eq.s32.totalorder %v37, %v287
  %vm332 = vcmp.eq.s32.totalorder %v38, %v283
  %vm333 = vcmp.eq.s32.totalorder %v38, %v287
  %vm334 = vcmp.eq.s32.totalorder %v39, %v283
  %vm335 = vcmp.eq.s32.totalorder %v39, %v287
  %vm336 = vcmp.eq.s32.totalorder %v40, %v283
  %vm337 = vcmp.eq.s32.totalorder %v40, %v287
  %vm338 = vcmp.eq.s32.totalorder %v41, %v283
  %vm339 = vcmp.eq.s32.totalorder %v41, %v287
  %vm340 = vcmp.eq.s32.totalorder %v42, %v283
  %vm341 = vcmp.eq.s32.totalorder %v42, %v287
  %vm342 = vcmp.eq.s32.totalorder %v43, %v283
  %vm343 = vcmp.eq.s32.totalorder %v43, %v287
  %vm344 = vcmp.eq.s32.totalorder %v44, %v283
  %vm345 = vcmp.eq.s32.totalorder %v44, %v287
  %vm346 = vcmp.eq.s32.totalorder %v45, %v283
  %vm347 = vcmp.eq.s32.totalorder %v45, %v287
  %vm348 = vcmp.eq.s32.totalorder %v46, %v283
  %vm349 = vcmp.eq.s32.totalorder %v46, %v287
  %vm350 = vcmp.eq.s32.totalorder %v47, %v283
  %vm351 = vcmp.eq.s32.totalorder %v47, %v287
  %v353 = vlaneseq
  %v354 = vshrl.u32 %v353, 7
  %v355 = vsub.s32 0, %v354
  %v356 = vrot.slane %v92, %v355
  %v357 = vlaneseq
  %v358 = vshrl.u32 %v357, 7
  %v359 = vsub.s32 2, %v358
  %v360 = vrot.slane %v92, %v359
  %v363 = vlaneseq
  %v364 = vshrl.u32 %v363, 7
  %v365 = vsub.s32 0, %v364
  %v366 = vrot.slane %v356, %v365
  %v367 = vlaneseq
  %v368 = vshrl.u32 %v367, 7
  %v369 = vsub.s32 0, %v368
  %v370 = vrot.slane %v360, %v369
  %v371 = vsel %vm288, %v366, 0.0
  %v372 = vsel %vm289, %v370, 0.0
  %v373 = vsel %vm290, %v366, 0.0
  %v374 = vsel %vm291, %v370, 0.0
  %v375 = vsel %vm292, %v366, 0.0
  %v376 = vsel %vm293, %v370, 0.0
  %v377 = vsel %vm294, %v366, 0.0
  %v378 = vsel %vm295, %v370, 0.0
  %v379 = vsel %vm296, %v366, 0.0
  %v380 = vsel %vm297, %v370, 0.0
  %v381 = vsel %vm298, %v366, 0.0
  %v382 = vsel %vm299, %v370, 0.0
  %v383 = vsel %vm300, %v366, 0.0
  %v384 = vsel %vm301, %v370, 0.0
  %v385 = vsel %vm302, %v366, 0.0
  %v386 = vsel %vm303, %v370, 0.0
  %v387 = vsel %vm304, %v366, 0.0
  %v388 = vsel %vm305, %v370, 0.0
  %v389 = vsel %vm306, %v366, 0.0
  %v390 = vsel %vm307, %v370, 0.0
  %v391 = vsel %vm308, %v366, 0.0
  %v392 = vsel %vm309, %v370, 0.0
  %v393 = vsel %vm310, %v366, 0.0
  %v394 = vsel %vm311, %v370, 0.0
  %v395 = vsel %vm312, %v366, 0.0
  %v396 = vsel %vm313, %v370, 0.0
  %v397 = vsel %vm314, %v366, 0.0
  %v398 = vsel %vm315, %v370, 0.0
  %v399 = vsel %vm316, %v366, 0.0
  %v400 = vsel %vm317, %v370, 0.0
  %v401 = vsel %vm318, %v366, 0.0
  %v402 = vsel %vm319, %v370, 0.0
  %v403 = vsel %vm320, %v366, 0.0
  %v404 = vsel %vm321, %v370, 0.0
  %v405 = vsel %vm322, %v366, 0.0
  %v406 = vsel %vm323, %v370, 0.0
  %v407 = vsel %vm324, %v366, 0.0
  %v408 = vsel %vm325, %v370, 0.0
  %v409 = vsel %vm326, %v366, 0.0
  %v410 = vsel %vm327, %v370, 0.0
  %v411 = vsel %vm328, %v366, 0.0
  %v412 = vsel %vm329, %v370, 0.0
  %v413 = vsel %vm330, %v366, 0.0
  %v414 = vsel %vm331, %v370, 0.0
  %v415 = vsel %vm332, %v366, 0.0
  %v416 = vsel %vm333, %v370, 0.0
  %v417 = vsel %vm334, %v366, 0.0
  %v418 = vsel %vm335, %v370, 0.0
  %v419 = vsel %vm336, %v366, 0.0
  %v420 = vsel %vm337, %v370, 0.0
  %v421 = vsel %vm338, %v366, 0.0
  %v422 = vsel %vm339, %v370, 0.0
  %v423 = vsel %vm340, %v366, 0.0
  %v424 = vsel %vm341, %v370, 0.0
  %v425 = vsel %vm342, %v366, 0.0
  %v426 = vsel %vm343, %v370, 0.0
  %v427 = vsel %vm344, %v366, 0.0
  %v428 = vsel %vm345, %v370, 0.0
  %v429 = vsel %vm346, %v366, 0.0
  %v430 = vsel %vm347, %v370, 0.0
  %v431 = vsel %vm348, %v366, 0.0
  %v432 = vsel %vm349, %v370, 0.0
  %v433 = vsel %vm350, %v366, 0.0
  %v434 = vsel %vm351, %v370, 0.0
  %v435 = vadd.f32 %v208, %v371
  %v436 = vadd.f32 %v209, %v372
  %v437 = vadd.f32 %v210, %v373
  %v438 = vadd.f32 %v211, %v374
  %v439 = vadd.f32 %v212, %v375
  %v440 = vadd.f32 %v213, %v376
  %v441 = vadd.f32 %v214, %v377
  %v442 = vadd.f32 %v215, %v378
  %v443 = vadd.f32 %v216, %v379
  %v444 = vadd.f32 %v217, %v380
  %v445 = vadd.f32 %v218, %v381
  %v446 = vadd.f32 %v219, %v382
  %v447 = vadd.f32 %v220, %v383
  %v448 = vadd.f32 %v221, %v384
  %v449 = vadd.f32 %v222, %v385
  %v450 = vadd.f32 %v223, %v386
  %v451 = vadd.f32 %v224, %v387
  %v452 = vadd.f32 %v225, %v388
  %v453 = vadd.f32 %v226, %v389
  %v454 = vadd.f32 %v227, %v390
  %v455 = vadd.f32 %v228, %v391
  %v456 = vadd.f32 %v229, %v392
  %v457 = vadd.f32 %v230, %v393
  %v458 = vadd.f32 %v231, %v394
  %v459 = vadd.f32 %v232, %v395
  %v460 = vadd.f32 %v233, %v396
  %v461 = vadd.f32 %v234, %v397
  %v462 = vadd.f32 %v235, %v398
  %v463 = vadd.f32 %v236, %v399
  %v464 = vadd.f32 %v237, %v400
  %v465 = vadd.f32 %v238, %v401
  %v466 = vadd.f32 %v239, %v402
  %v467 = vadd.f32 %v240, %v403
  %v468 = vadd.f32 %v241, %v404
  %v469 = vadd.f32 %v242, %v405
  %v470 = vadd.f32 %v243, %v406
  %v471 = vadd.f32 %v244, %v407
  %v472 = vadd.f32 %v245, %v408
  %v473 = vadd.f32 %v246, %v409
  %v474 = vadd.f32 %v247, %v410
  %v475 = vadd.f32 %v248, %v411
  %v476 = vadd.f32 %v249, %v412
  %v477 = vadd.f32 %v250, %v413
  %v478 = vadd.f32 %v251, %v414
  %v479 = vadd.f32 %v252, %v415
  %v480 = vadd.f32 %v253, %v416
  %v481 = vadd.f32 %v254, %v417
  %v482 = vadd.f32 %v255, %v418
  %v483 = vadd.f32 %v256, %v419
  %v484 = vadd.f32 %v257, %v420
  %v485 = vadd.f32 %v258, %v421
  %v486 = vadd.f32 %v259, %v422
  %v487 = vadd.f32 %v260, %v423
  %v488 = vadd.f32 %v261, %v424
  %v489 = vadd.f32 %v262, %v425
  %v490 = vadd.f32 %v263, %v426
  %v491 = vadd.f32 %v264, %v427
  %v492 = vadd.f32 %v265, %v428
  %v493 = vadd.f32 %v266, %v429
  %v494 = vadd.f32 %v267, %v430
  %v495 = vadd.f32 %v268, %v431
  %v496 = vadd.f32 %v269, %v432
  %v497 = vadd.f32 %v270, %v433
  %v498 = vadd.f32 %v271, %v434
  %v499 = vlaneseq
  %v500 = vshrl.u32 %v499, 7
  %v501 = vsub.s32 0, %v500
  %v502 = vrot.slane %v107, %v501
  %v503 = vlaneseq
  %v504 = vshrl.u32 %v503, 7
  %v505 = vsub.s32 2, %v504
  %v506 = vrot.slane %v107, %v505
  %v507 = vlaneseq
  %v508 = vshrl.u32 %v507, 7
  %v509 = vsub.s32 0, %v508
  %v510 = vrot.slane %v502, %v509
  %v511 = vlaneseq
  %v512 = vshrl.u32 %v511, 7
  %v513 = vsub.s32 0, %v512
  %v514 = vrot.slane %v506, %v513
  %vm515 = vcmp.eq.s32.totalorder %v16, %v510
  %vm516 = vcmp.eq.s32.totalorder %v16, %v514
  %vm517 = vcmp.eq.s32.totalorder %v17, %v510
  %vm518 = vcmp.eq.s32.totalorder %v17, %v514
  %vm519 = vcmp.eq.s32.totalorder %v18, %v510
  %vm520 = vcmp.eq.s32.totalorder %v18, %v514
  %vm521 = vcmp.eq.s32.totalorder %v19, %v510
  %vm522 = vcmp.eq.s32.totalorder %v19, %v514
  %vm523 = vcmp.eq.s32.totalorder %v20, %v510
  %vm524 = vcmp.eq.s32.totalorder %v20, %v514
  %vm525 = vcmp.eq.s32.totalorder %v21, %v510
  %vm526 = vcmp.eq.s32.totalorder %v21, %v514
  %vm527 = vcmp.eq.s32.totalorder %v22, %v510
  %vm528 = vcmp.eq.s32.totalorder %v22, %v514
  %vm529 = vcmp.eq.s32.totalorder %v23, %v510
  %vm530 = vcmp.eq.s32.totalorder %v23, %v514
  %vm531 = vcmp.eq.s32.totalorder %v24, %v510
  %vm532 = vcmp.eq.s32.totalorder %v24, %v514
  %vm533 = vcmp.eq.s32.totalorder %v25, %v510
  %vm534 = vcmp.eq.s32.totalorder %v25, %v514
  %vm535 = vcmp.eq.s32.totalorder %v26, %v510
  %vm536 = vcmp.eq.s32.totalorder %v26, %v514
  %vm537 = vcmp.eq.s32.totalorder %v27, %v510
  %vm538 = vcmp.eq.s32.totalorder %v27, %v514
  %vm539 = vcmp.eq.s32.totalorder %v28, %v510
  %vm540 = vcmp.eq.s32.totalorder %v28, %v514
  %vm541 = vcmp.eq.s32.totalorder %v29, %v510
  %vm542 = vcmp.eq.s32.totalorder %v29, %v514
  %vm543 = vcmp.eq.s32.totalorder %v30, %v510
  %vm544 = vcmp.eq.s32.totalorder %v30, %v514
  %vm545 = vcmp.eq.s32.totalorder %v31, %v510
  %vm546 = vcmp.eq.s32.totalorder %v31, %v514
  %vm547 = vcmp.eq.s32.totalorder %v32, %v510
  %vm548 = vcmp.eq.s32.totalorder %v32, %v514
  %vm549 = vcmp.eq.s32.totalorder %v33, %v510
  %vm550 = vcmp.eq.s32.totalorder %v33, %v514
  %vm551 = vcmp.eq.s32.totalorder %v34, %v510
  %vm552 = vcmp.eq.s32.totalorder %v34, %v514
  %vm553 = vcmp.eq.s32.totalorder %v35, %v510
  %vm554 = vcmp.eq.s32.totalorder %v35, %v514
  %vm555 = vcmp.eq.s32.totalorder %v36, %v510
  %vm556 = vcmp.eq.s32.totalorder %v36, %v514
  %vm557 = vcmp.eq.s32.totalorder %v37, %v510
  %vm558 = vcmp.eq.s32.totalorder %v37, %v514
  %vm559 = vcmp.eq.s32.totalorder %v38, %v510
  %vm560 = vcmp.eq.s32.totalorder %v38, %v514
  %vm561 = vcmp.eq.s32.totalorder %v39, %v510
  %vm562 = vcmp.eq.s32.totalorder %v39, %v514
  %vm563 = vcmp.eq.s32.totalorder %v40, %v510
  %vm564 = vcmp.eq.s32.totalorder %v40, %v514
  %vm565 = vcmp.eq.s32.totalorder %v41, %v510
  %vm566 = vcmp.eq.s32.totalorder %v41, %v514
  %vm567 = vcmp.eq.s32.totalorder %v42, %v510
  %vm568 = vcmp.eq.s32.totalorder %v42, %v514
  %vm569 = vcmp.eq.s32.totalorder %v43, %v510
  %vm570 = vcmp.eq.s32.totalorder %v43, %v514
  %vm571 = vcmp.eq.s32.totalorder %v44, %v510
  %vm572 = vcmp.eq.s32.totalorder %v44, %v514
  %vm573 = vcmp.eq.s32.totalorder %v45, %v510
  %vm574 = vcmp.eq.s32.totalorder %v45, %v514
  %vm575 = vcmp.eq.s32.totalorder %v46, %v510
  %vm576 = vcmp.eq.s32.totalorder %v46, %v514
  %vm577 = vcmp.eq.s32.totalorder %v47, %v510
  %vm578 = vcmp.eq.s32.totalorder %v47, %v514
  %v580 = vlaneseq
  %v581 = vshrl.u32 %v580, 7
  %v582 = vsub.s32 0, %v581
  %v583 = vrot.slane %v95, %v582
  %v584 = vlaneseq
  %v585 = vshrl.u32 %v584, 7
  %v586 = vsub.s32 2, %v585
  %v587 = vrot.slane %v95, %v586
  %v590 = vlaneseq
  %v591 = vshrl.u32 %v590, 7
  %v592 = vsub.s32 0, %v591
  %v593 = vrot.slane %v583, %v592
  %v594 = vlaneseq
  %v595 = vshrl.u32 %v594, 7
  %v596 = vsub.s32 0, %v595
  %v597 = vrot.slane %v587, %v596
  %v598 = vsel %vm515, %v593, 0.0
  %v599 = vsel %vm516, %v597, 0.0
  %v600 = vsel %vm517, %v593, 0.0
  %v601 = vsel %vm518, %v597, 0.0
  %v602 = vsel %vm519, %v593, 0.0
  %v603 = vsel %vm520, %v597, 0.0
  %v604 = vsel %vm521, %v593, 0.0
  %v605 = vsel %vm522, %v597, 0.0
  %v606 = vsel %vm523, %v593, 0.0
  %v607 = vsel %vm524, %v597, 0.0
  %v608 = vsel %vm525, %v593, 0.0
  %v609 = vsel %vm526, %v597, 0.0
  %v610 = vsel %vm527, %v593, 0.0
  %v611 = vsel %vm528, %v597, 0.0
  %v612 = vsel %vm529, %v593, 0.0
  %v613 = vsel %vm530, %v597, 0.0
  %v614 = vsel %vm531, %v593, 0.0
  %v615 = vsel %vm532, %v597, 0.0
  %v616 = vsel %vm533, %v593, 0.0
  %v617 = vsel %vm534, %v597, 0.0
  %v618 = vsel %vm535, %v593, 0.0
  %v619 = vsel %vm536, %v597, 0.0
  %v620 = vsel %vm537, %v593, 0.0
  %v621 = vsel %vm538, %v597, 0.0
  %v622 = vsel %vm539, %v593, 0.0
  %v623 = vsel %vm540, %v597, 0.0
  %v624 = vsel %vm541, %v593, 0.0
  %v625 = vsel %vm542, %v597, 0.0
  %v626 = vsel %vm543, %v593, 0.0
  %v627 = vsel %vm544, %v597, 0.0
  %v628 = vsel %vm545, %v593, 0.0
  %v629 = vsel %vm546, %v597, 0.0
  %v630 = vsel %vm547, %v593, 0.0
  %v631 = vsel %vm548, %v597, 0.0
  %v632 = vsel %vm549, %v593, 0.0
  %v633 = vsel %vm550, %v597, 0.0
  %v634 = vsel %vm551, %v593, 0.0
  %v635 = vsel %vm552, %v597, 0.0
  %v636 = vsel %vm553, %v593, 0.0
  %v637 = vsel %vm554, %v597, 0.0
  %v638 = vsel %vm555, %v593, 0.0
  %v639 = vsel %vm556, %v597, 0.0
  %v640 = vsel %vm557, %v593, 0.0
  %v641 = vsel %vm558, %v597, 0.0
  %v642 = vsel %vm559, %v593, 0.0
  %v643 = vsel %vm560, %v597, 0.0
  %v644 = vsel %vm561, %v593, 0.0
  %v645 = vsel %vm562, %v597, 0.0
  %v646 = vsel %vm563, %v593, 0.0
  %v647 = vsel %vm564, %v597, 0.0
  %v648 = vsel %vm565, %v593, 0.0
  %v649 = vsel %vm566, %v597, 0.0
  %v650 = vsel %vm567, %v593, 0.0
  %v651 = vsel %vm568, %v597, 0.0
  %v652 = vsel %vm569, %v593, 0.0
  %v653 = vsel %vm570, %v597, 0.0
  %v654 = vsel %vm571, %v593, 0.0
  %v655 = vsel %vm572, %v597, 0.0
  %v656 = vsel %vm573, %v593, 0.0
  %v657 = vsel %vm574, %v597, 0.0
  %v658 = vsel %vm575, %v593, 0.0
  %v659 = vsel %vm576, %v597, 0.0
  %v660 = vsel %vm577, %v593, 0.0
  %v661 = vsel %vm578, %v597, 0.0
  %v662 = vadd.f32 %v435, %v598
  %v663 = vadd.f32 %v436, %v599
  %v664 = vadd.f32 %v437, %v600
  %v665 = vadd.f32 %v438, %v601
  %v666 = vadd.f32 %v439, %v602
  %v667 = vadd.f32 %v440, %v603
  %v668 = vadd.f32 %v441, %v604
  %v669 = vadd.f32 %v442, %v605
  %v670 = vadd.f32 %v443, %v606
  %v671 = vadd.f32 %v444, %v607
  %v672 = vadd.f32 %v445, %v608
  %v673 = vadd.f32 %v446, %v609
  %v674 = vadd.f32 %v447, %v610
  %v675 = vadd.f32 %v448, %v611
  %v676 = vadd.f32 %v449, %v612
  %v677 = vadd.f32 %v450, %v613
  %v678 = vadd.f32 %v451, %v614
  %v679 = vadd.f32 %v452, %v615
  %v680 = vadd.f32 %v453, %v616
  %v681 = vadd.f32 %v454, %v617
  %v682 = vadd.f32 %v455, %v618
  %v683 = vadd.f32 %v456, %v619
  %v684 = vadd.f32 %v457, %v620
  %v685 = vadd.f32 %v458, %v621
  %v686 = vadd.f32 %v459, %v622
  %v687 = vadd.f32 %v460, %v623
  %v688 = vadd.f32 %v461, %v624
  %v689 = vadd.f32 %v462, %v625
  %v690 = vadd.f32 %v463, %v626
  %v691 = vadd.f32 %v464, %v627
  %v692 = vadd.f32 %v465, %v628
  %v693 = vadd.f32 %v466, %v629
  %v694 = vadd.f32 %v467, %v630
  %v695 = vadd.f32 %v468, %v631
  %v696 = vadd.f32 %v469, %v632
  %v697 = vadd.f32 %v470, %v633
  %v698 = vadd.f32 %v471, %v634
  %v699 = vadd.f32 %v472, %v635
  %v700 = vadd.f32 %v473, %v636
  %v701 = vadd.f32 %v474, %v637
  %v702 = vadd.f32 %v475, %v638
  %v703 = vadd.f32 %v476, %v639
  %v704 = vadd.f32 %v477, %v640
  %v705 = vadd.f32 %v478, %v641
  %v706 = vadd.f32 %v479, %v642
  %v707 = vadd.f32 %v480, %v643
  %v708 = vadd.f32 %v481, %v644
  %v709 = vadd.f32 %v482, %v645
  %v710 = vadd.f32 %v483, %v646
  %v711 = vadd.f32 %v484, %v647
  %v712 = vadd.f32 %v485, %v648
  %v713 = vadd.f32 %v486, %v649
  %v714 = vadd.f32 %v487, %v650
  %v715 = vadd.f32 %v488, %v651
  %v716 = vadd.f32 %v489, %v652
  %v717 = vadd.f32 %v490, %v653
  %v718 = vadd.f32 %v491, %v654
  %v719 = vadd.f32 %v492, %v655
  %v720 = vadd.f32 %v493, %v656
  %v721 = vadd.f32 %v494, %v657
  %v722 = vadd.f32 %v495, %v658
  %v723 = vadd.f32 %v496, %v659
  %v724 = vadd.f32 %v497, %v660
  %v725 = vadd.f32 %v498, %v661
  %v726 = vlaneseq
  %v727 = vshrl.u32 %v726, 7
  %v728 = vsub.s32 0, %v727
  %v729 = vrot.slane %v108, %v728
  %v730 = vlaneseq
  %v731 = vshrl.u32 %v730, 7
  %v732 = vsub.s32 2, %v731
  %v733 = vrot.slane %v108, %v732
  %v734 = vlaneseq
  %v735 = vshrl.u32 %v734, 7
  %v736 = vsub.s32 0, %v735
  %v737 = vrot.slane %v729, %v736
  %v738 = vlaneseq
  %v739 = vshrl.u32 %v738, 7
  %v740 = vsub.s32 0, %v739
  %v741 = vrot.slane %v733, %v740
  %vm742 = vcmp.eq.s32.totalorder %v16, %v737
  %vm743 = vcmp.eq.s32.totalorder %v16, %v741
  %vm744 = vcmp.eq.s32.totalorder %v17, %v737
  %vm745 = vcmp.eq.s32.totalorder %v17, %v741
  %vm746 = vcmp.eq.s32.totalorder %v18, %v737
  %vm747 = vcmp.eq.s32.totalorder %v18, %v741
  %vm748 = vcmp.eq.s32.totalorder %v19, %v737
  %vm749 = vcmp.eq.s32.totalorder %v19, %v741
  %vm750 = vcmp.eq.s32.totalorder %v20, %v737
  %vm751 = vcmp.eq.s32.totalorder %v20, %v741
  %vm752 = vcmp.eq.s32.totalorder %v21, %v737
  %vm753 = vcmp.eq.s32.totalorder %v21, %v741
  %vm754 = vcmp.eq.s32.totalorder %v22, %v737
  %vm755 = vcmp.eq.s32.totalorder %v22, %v741
  %vm756 = vcmp.eq.s32.totalorder %v23, %v737
  %vm757 = vcmp.eq.s32.totalorder %v23, %v741
  %vm758 = vcmp.eq.s32.totalorder %v24, %v737
  %vm759 = vcmp.eq.s32.totalorder %v24, %v741
  %vm760 = vcmp.eq.s32.totalorder %v25, %v737
  %vm761 = vcmp.eq.s32.totalorder %v25, %v741
  %vm762 = vcmp.eq.s32.totalorder %v26, %v737
  %vm763 = vcmp.eq.s32.totalorder %v26, %v741
  %vm764 = vcmp.eq.s32.totalorder %v27, %v737
  %vm765 = vcmp.eq.s32.totalorder %v27, %v741
  %vm766 = vcmp.eq.s32.totalorder %v28, %v737
  %vm767 = vcmp.eq.s32.totalorder %v28, %v741
  %vm768 = vcmp.eq.s32.totalorder %v29, %v737
  %vm769 = vcmp.eq.s32.totalorder %v29, %v741
  %vm770 = vcmp.eq.s32.totalorder %v30, %v737
  %vm771 = vcmp.eq.s32.totalorder %v30, %v741
  %vm772 = vcmp.eq.s32.totalorder %v31, %v737
  %vm773 = vcmp.eq.s32.totalorder %v31, %v741
  %vm774 = vcmp.eq.s32.totalorder %v32, %v737
  %vm775 = vcmp.eq.s32.totalorder %v32, %v741
  %vm776 = vcmp.eq.s32.totalorder %v33, %v737
  %vm777 = vcmp.eq.s32.totalorder %v33, %v741
  %vm778 = vcmp.eq.s32.totalorder %v34, %v737
  %vm779 = vcmp.eq.s32.totalorder %v34, %v741
  %vm780 = vcmp.eq.s32.totalorder %v35, %v737
  %vm781 = vcmp.eq.s32.totalorder %v35, %v741
  %vm782 = vcmp.eq.s32.totalorder %v36, %v737
  %vm783 = vcmp.eq.s32.totalorder %v36, %v741
  %vm784 = vcmp.eq.s32.totalorder %v37, %v737
  %vm785 = vcmp.eq.s32.totalorder %v37, %v741
  %vm786 = vcmp.eq.s32.totalorder %v38, %v737
  %vm787 = vcmp.eq.s32.totalorder %v38, %v741
  %vm788 = vcmp.eq.s32.totalorder %v39, %v737
  %vm789 = vcmp.eq.s32.totalorder %v39, %v741
  %vm790 = vcmp.eq.s32.totalorder %v40, %v737
  %vm791 = vcmp.eq.s32.totalorder %v40, %v741
  %vm792 = vcmp.eq.s32.totalorder %v41, %v737
  %vm793 = vcmp.eq.s32.totalorder %v41, %v741
  %vm794 = vcmp.eq.s32.totalorder %v42, %v737
  %vm795 = vcmp.eq.s32.totalorder %v42, %v741
  %vm796 = vcmp.eq.s32.totalorder %v43, %v737
  %vm797 = vcmp.eq.s32.totalorder %v43, %v741
  %vm798 = vcmp.eq.s32.totalorder %v44, %v737
  %vm799 = vcmp.eq.s32.totalorder %v44, %v741
  %vm800 = vcmp.eq.s32.totalorder %v45, %v737
  %vm801 = vcmp.eq.s32.totalorder %v45, %v741
  %vm802 = vcmp.eq.s32.totalorder %v46, %v737
  %vm803 = vcmp.eq.s32.totalorder %v46, %v741
  %vm804 = vcmp.eq.s32.totalorder %v47, %v737
  %vm805 = vcmp.eq.s32.totalorder %v47, %v741
  %v807 = vlaneseq
  %v808 = vshrl.u32 %v807, 7
  %v809 = vsub.s32 0, %v808
  %v810 = vrot.slane %v98, %v809
  %v811 = vlaneseq
  %v812 = vshrl.u32 %v811, 7
  %v813 = vsub.s32 2, %v812
  %v814 = vrot.slane %v98, %v813
  %v817 = vlaneseq
  %v818 = vshrl.u32 %v817, 7
  %v819 = vsub.s32 0, %v818
  %v820 = vrot.slane %v810, %v819
  %v821 = vlaneseq
  %v822 = vshrl.u32 %v821, 7
  %v823 = vsub.s32 0, %v822
  %v824 = vrot.slane %v814, %v823
  %v825 = vsel %vm742, %v820, 0.0
  %v826 = vsel %vm743, %v824, 0.0
  %v827 = vsel %vm744, %v820, 0.0
  %v828 = vsel %vm745, %v824, 0.0
  %v829 = vsel %vm746, %v820, 0.0
  %v830 = vsel %vm747, %v824, 0.0
  %v831 = vsel %vm748, %v820, 0.0
  %v832 = vsel %vm749, %v824, 0.0
  %v833 = vsel %vm750, %v820, 0.0
  %v834 = vsel %vm751, %v824, 0.0
  %v835 = vsel %vm752, %v820, 0.0
  %v836 = vsel %vm753, %v824, 0.0
  %v837 = vsel %vm754, %v820, 0.0
  %v838 = vsel %vm755, %v824, 0.0
  %v839 = vsel %vm756, %v820, 0.0
  %v840 = vsel %vm757, %v824, 0.0
  %v841 = vsel %vm758, %v820, 0.0
  %v842 = vsel %vm759, %v824, 0.0
  %v843 = vsel %vm760, %v820, 0.0
  %v844 = vsel %vm761, %v824, 0.0
  %v845 = vsel %vm762, %v820, 0.0
  %v846 = vsel %vm763, %v824, 0.0
  %v847 = vsel %vm764, %v820, 0.0
  %v848 = vsel %vm765, %v824, 0.0
  %v849 = vsel %vm766, %v820, 0.0
  %v850 = vsel %vm767, %v824, 0.0
  %v851 = vsel %vm768, %v820, 0.0
  %v852 = vsel %vm769, %v824, 0.0
  %v853 = vsel %vm770, %v820, 0.0
  %v854 = vsel %vm771, %v824, 0.0
  %v855 = vsel %vm772, %v820, 0.0
  %v856 = vsel %vm773, %v824, 0.0
  %v857 = vsel %vm774, %v820, 0.0
  %v858 = vsel %vm775, %v824, 0.0
  %v859 = vsel %vm776, %v820, 0.0
  %v860 = vsel %vm777, %v824, 0.0
  %v861 = vsel %vm778, %v820, 0.0
  %v862 = vsel %vm779, %v824, 0.0
  %v863 = vsel %vm780, %v820, 0.0
  %v864 = vsel %vm781, %v824, 0.0
  %v865 = vsel %vm782, %v820, 0.0
  %v866 = vsel %vm783, %v824, 0.0
  %v867 = vsel %vm784, %v820, 0.0
  %v868 = vsel %vm785, %v824, 0.0
  %v869 = vsel %vm786, %v820, 0.0
  %v870 = vsel %vm787, %v824, 0.0
  %v871 = vsel %vm788, %v820, 0.0
  %v872 = vsel %vm789, %v824, 0.0
  %v873 = vsel %vm790, %v820, 0.0
  %v874 = vsel %vm791, %v824, 0.0
  %v875 = vsel %vm792, %v820, 0.0
  %v876 = vsel %vm793, %v824, 0.0
  %v877 = vsel %vm794, %v820, 0.0
  %v878 = vsel %vm795, %v824, 0.0
  %v879 = vsel %vm796, %v820, 0.0
  %v880 = vsel %vm797, %v824, 0.0
  %v881 = vsel %vm798, %v820, 0.0
  %v882 = vsel %vm799, %v824, 0.0
  %v883 = vsel %vm800, %v820, 0.0
  %v884 = vsel %vm801, %v824, 0.0
  %v885 = vsel %vm802, %v820, 0.0
  %v886 = vsel %vm803, %v824, 0.0
  %v887 = vsel %vm804, %v820, 0.0
  %v888 = vsel %vm805, %v824, 0.0
  %v889 = vadd.f32 %v662, %v825
  %v890 = vadd.f32 %v663, %v826
  %v891 = vadd.f32 %v664, %v827
  %v892 = vadd.f32 %v665, %v828
  %v893 = vadd.f32 %v666, %v829
  %v894 = vadd.f32 %v667, %v830
  %v895 = vadd.f32 %v668, %v831
  %v896 = vadd.f32 %v669, %v832
  %v897 = vadd.f32 %v670, %v833
  %v898 = vadd.f32 %v671, %v834
  %v899 = vadd.f32 %v672, %v835
  %v900 = vadd.f32 %v673, %v836
  %v901 = vadd.f32 %v674, %v837
  %v902 = vadd.f32 %v675, %v838
  %v903 = vadd.f32 %v676, %v839
  %v904 = vadd.f32 %v677, %v840
  %v905 = vadd.f32 %v678, %v841
  %v906 = vadd.f32 %v679, %v842
  %v907 = vadd.f32 %v680, %v843
  %v908 = vadd.f32 %v681, %v844
  %v909 = vadd.f32 %v682, %v845
  %v910 = vadd.f32 %v683, %v846
  %v911 = vadd.f32 %v684, %v847
  %v912 = vadd.f32 %v685, %v848
  %v913 = vadd.f32 %v686, %v849
  %v914 = vadd.f32 %v687, %v850
  %v915 = vadd.f32 %v688, %v851
  %v916 = vadd.f32 %v689, %v852
  %v917 = vadd.f32 %v690, %v853
  %v918 = vadd.f32 %v691, %v854
  %v919 = vadd.f32 %v692, %v855
  %v920 = vadd.f32 %v693, %v856
  %v921 = vadd.f32 %v694, %v857
  %v922 = vadd.f32 %v695, %v858
  %v923 = vadd.f32 %v696, %v859
  %v924 = vadd.f32 %v697, %v860
  %v925 = vadd.f32 %v698, %v861
  %v926 = vadd.f32 %v699, %v862
  %v927 = vadd.f32 %v700, %v863
  %v928 = vadd.f32 %v701, %v864
  %v929 = vadd.f32 %v702, %v865
  %v930 = vadd.f32 %v703, %v866
  %v931 = vadd.f32 %v704, %v867
  %v932 = vadd.f32 %v705, %v868
  %v933 = vadd.f32 %v706, %v869
  %v934 = vadd.f32 %v707, %v870
  %v935 = vadd.f32 %v708, %v871
  %v936 = vadd.f32 %v709, %v872
  %v937 = vadd.f32 %v710, %v873
  %v938 = vadd.f32 %v711, %v874
  %v939 = vadd.f32 %v712, %v875
  %v940 = vadd.f32 %v713, %v876
  %v941 = vadd.f32 %v714, %v877
  %v942 = vadd.f32 %v715, %v878
  %v943 = vadd.f32 %v716, %v879
  %v944 = vadd.f32 %v717, %v880
  %v945 = vadd.f32 %v718, %v881
  %v946 = vadd.f32 %v719, %v882
  %v947 = vadd.f32 %v720, %v883
  %v948 = vadd.f32 %v721, %v884
  %v949 = vadd.f32 %v722, %v885
  %v950 = vadd.f32 %v723, %v886
  %v951 = vadd.f32 %v724, %v887
  %v952 = vadd.f32 %v725, %v888
  %v953 = vld [vmem:[%s2] sm:$0xff]
  %v955 = vcombine.high %v953, %v953
  %957 = vmatprep.subr.mxu0 %v920
  %958 = vmatpush1.msra.mxu0 %v919
  %959 = vmatprep.subr.mxu0 %v918
  %960 = vmatpush1.msra.mxu0 %v917
  %961 = vmatprep.subr.mxu0 %v916
  %962 = vmatpush1.msra.mxu0 %v915
  %963 = vmatprep.subr.mxu0 %v914
  %964 = vmatpush1.msra.mxu0 %v913
  %965 = vmatprep.subr.mxu0 %v912
  %966 = vmatpush1.msra.mxu0 %v911
  %967 = vmatprep.subr.mxu0 %v910
  %968 = vmatpush1.msra.mxu0 %v909
  %969 = vmatprep.subr.mxu0 %v908
  %970 = vmatpush1.msra.mxu0 %v907
  %971 = vmatprep.subr.mxu0 %v906
  %972 = vmatpush1.msra.mxu0 %v905
  %973 = vmatprep.subr.mxu0 %v904
  %974 = vmatpush1.msra.mxu0 %v903
  %975 = vmatprep.subr.mxu0 %v902
  %976 = vmatpush1.msra.mxu0 %v901
  %977 = vmatprep.subr.mxu0 %v900
  %978 = vmatpush1.msra.mxu0 %v899
  %979 = vmatprep.subr.mxu0 %v898
  %980 = vmatpush1.msra.mxu0 %v897
  %981 = vmatprep.subr.mxu0 %v896
  %982 = vmatpush1.msra.mxu0 %v895
  %983 = vmatprep.subr.mxu0 %v894
  %984 = vmatpush1.msra.mxu0 %v893
  %985 = vmatprep.subr.mxu0 %v892
  %986 = vmatpush1.msra.mxu0 %v891
  %987 = vmatprep.subr.mxu0 %v890
  %988 = vmatpush1.msra.mxu0 %v889
  %989 = vmatprep.subr.mxu0 %v952
  %990 = vmatpush2.msra.mxu0 %v951
  %991 = vmatprep.subr.mxu0 %v950
  %992 = vmatpush2.msra.mxu0 %v949
  %993 = vmatprep.subr.mxu0 %v948
  %994 = vmatpush2.msra.mxu0 %v947
  %995 = vmatprep.subr.mxu0 %v946
  %996 = vmatpush2.msra.mxu0 %v945
  %997 = vmatprep.subr.mxu0 %v944
  %998 = vmatpush2.msra.mxu0 %v943
  %999 = vmatprep.subr.mxu0 %v942
  %1000 = vmatpush2.msra.mxu0 %v941
  %1001 = vmatprep.subr.mxu0 %v940
  %1002 = vmatpush2.msra.mxu0 %v939
  %1003 = vmatprep.subr.mxu0 %v938
  %1004 = vmatpush2.msra.mxu0 %v937
  %1005 = vmatprep.subr.mxu0 %v936
  %1006 = vmatpush2.msra.mxu0 %v935
  %1007 = vmatprep.subr.mxu0 %v934
  %1008 = vmatpush2.msra.mxu0 %v933
  %1009 = vmatprep.subr.mxu0 %v932
  %1010 = vmatpush2.msra.mxu0 %v931
  %1011 = vmatprep.subr.mxu0 %v930
  %1012 = vmatpush2.msra.mxu0 %v929
  %1013 = vmatprep.subr.mxu0 %v928
  %1014 = vmatpush2.msra.mxu0 %v927
  %1015 = vmatprep.subr.mxu0 %v926
  %1016 = vmatpush2.msra.mxu0 %v925
  %1017 = vmatprep.subr.mxu0 %v924
  %1018 = vmatpush2.msra.mxu0 %v923
  %1019 = vmatprep.subr.mxu0 %v922
  %1020 = vmatpush2.msra.mxu0 %v921
  %1021 = vmatprep.mubr.f32.mxu0 %v955
  %1022 = vmatmul.mubr.f32.gmra.mxu0 %v953
  %v1023 = vpop.f32.mrf.mxu0
  %v1024 = vadd.f32 0.0, %v1023
  %v1025 = vpop.f32.mrf.mxu0
  %v1026 = vadd.f32 0.0, %v1025
  %1027 = vdwg.mxu0
  %v1030 = vcombine.low %v1024, %v1026
  %1032 = vst [vmem:[%s3] sm:$0xff] %v1030
  %s1033 = scalar_lea.vmem %s1, 4
  %v1034 = vld [vmem:[%s1033] sm:$0xf]
  %v1035 = vmul.f32 %v1034, 1.0666667
  %v1036 = vadd.f32 %v14, %v1035
  %v1037 = vfloor.f32 %v1036
  %v1038 = vsub.f32 %v1036, %v1037
  %v1039 = vsub.f32 1.0, %v1038
  %vm1040 = vcmp.ge.f32.partialorder %v1037, 0.0
  %vm1041 = vcmp.le.f32.partialorder %v1037, 15.0
  %vm1042 = vmand %vm1040, %vm1041
  %v1043 = vsel %vm1042, 1, 0
  %v1044 = vcvt.s32.f32 %v1043
  %vm1045 = vcmp.ge.f32.partialorder %v1037, -1.0
  %vm1046 = vcmp.le.f32.partialorder %v1037, 14.0
  %vm1047 = vmand %vm1045, %vm1046
  %v1048 = vsel %vm1047, 1, 0
  %v1049 = vcvt.s32.f32 %v1048
  %v1050 = vmax.f32 %v1037, 0.0
  %v1051 = vmin.f32 %v1050, 15.0
  %v1052 = vcvt.f32.s32.to.zero.pseudo %v1051
  %v1053 = vadd.f32 %v1037, 1.0
  %v1054 = vmax.f32 %v1053, 0.0
  %v1055 = vmin.f32 %v1054, 15.0
  %v1056 = vcvt.f32.s32.to.zero.pseudo %v1055
  %v1058 = vrot.slane %v1039, 7
  %v1059 = vrot.slane %v1058, 2
  %v1061 = vmul.f32 %v1039, %v1059
  %v1062 = vmul.f32 %v1061, %v1044
  %v1064 = vrot.slane %v1044, 7
  %v1065 = vrot.slane %v1064, 2
  %v1067 = vmul.f32 %v1062, %v1065
  %v1069 = vrot.slane %v1038, 7
  %v1070 = vrot.slane %v1069, 2
  %v1072 = vmul.f32 %v1039, %v1070
  %v1073 = vmul.f32 %v1072, %v1044
  %v1075 = vrot.slane %v1049, 7
  %v1076 = vrot.slane %v1075, 2
  %v1078 = vmul.f32 %v1073, %v1076
  %v1079 = vmul.f32 %v1038, %v1059
  %v1080 = vmul.f32 %v1079, %v1049
  %v1081 = vmul.f32 %v1080, %v1065
  %v1082 = vmul.f32 %v1038, %v1070
  %v1083 = vmul.f32 %v1082, %v1049
  %v1084 = vmul.f32 %v1083, %v1076
  %v1085 = vmul.u32 %v1052, 16
  %v1086 = vrot.slane %v1052, 7
  %v1087 = vrot.slane %v1086, 2
  %v1088 = vadd.s32 %v1085, %v1087
  %v1089 = vrot.slane %v1056, 7
  %v1090 = vrot.slane %v1089, 2
  %v1091 = vadd.s32 %v1085, %v1090
  %v1092 = vmul.u32 %v1056, 16
  %v1093 = vadd.s32 %v1092, %v1087
  %v1094 = vadd.s32 %v1092, %v1090
  %v1095 = vlaneseq
  %v1096 = vshrl.u32 %v1095, 7
  %v1097 = vsub.s32 0, %v1096
  %v1098 = vrot.slane %v1088, %v1097
  %v1099 = vlaneseq
  %v1100 = vshrl.u32 %v1099, 7
  %v1101 = vsub.s32 2, %v1100
  %v1102 = vrot.slane %v1088, %v1101
  %v1103 = vlaneseq
  %v1104 = vshrl.u32 %v1103, 7
  %v1105 = vsub.s32 0, %v1104
  %v1106 = vrot.slane %v1098, %v1105
  %v1107 = vlaneseq
  %v1108 = vshrl.u32 %v1107, 7
  %v1109 = vsub.s32 0, %v1108
  %v1110 = vrot.slane %v1102, %v1109
  %vm1111 = vcmp.eq.s32.totalorder %v16, %v1106
  %vm1112 = vcmp.eq.s32.totalorder %v16, %v1110
  %vm1113 = vcmp.eq.s32.totalorder %v17, %v1106
  %vm1114 = vcmp.eq.s32.totalorder %v17, %v1110
  %vm1115 = vcmp.eq.s32.totalorder %v18, %v1106
  %vm1116 = vcmp.eq.s32.totalorder %v18, %v1110
  %vm1117 = vcmp.eq.s32.totalorder %v19, %v1106
  %vm1118 = vcmp.eq.s32.totalorder %v19, %v1110
  %vm1119 = vcmp.eq.s32.totalorder %v20, %v1106
  %vm1120 = vcmp.eq.s32.totalorder %v20, %v1110
  %vm1121 = vcmp.eq.s32.totalorder %v21, %v1106
  %vm1122 = vcmp.eq.s32.totalorder %v21, %v1110
  %vm1123 = vcmp.eq.s32.totalorder %v22, %v1106
  %vm1124 = vcmp.eq.s32.totalorder %v22, %v1110
  %vm1125 = vcmp.eq.s32.totalorder %v23, %v1106
  %vm1126 = vcmp.eq.s32.totalorder %v23, %v1110
  %vm1127 = vcmp.eq.s32.totalorder %v24, %v1106
  %vm1128 = vcmp.eq.s32.totalorder %v24, %v1110
  %vm1129 = vcmp.eq.s32.totalorder %v25, %v1106
  %vm1130 = vcmp.eq.s32.totalorder %v25, %v1110
  %vm1131 = vcmp.eq.s32.totalorder %v26, %v1106
  %vm1132 = vcmp.eq.s32.totalorder %v26, %v1110
  %vm1133 = vcmp.eq.s32.totalorder %v27, %v1106
  %vm1134 = vcmp.eq.s32.totalorder %v27, %v1110
  %vm1135 = vcmp.eq.s32.totalorder %v28, %v1106
  %vm1136 = vcmp.eq.s32.totalorder %v28, %v1110
  %vm1137 = vcmp.eq.s32.totalorder %v29, %v1106
  %vm1138 = vcmp.eq.s32.totalorder %v29, %v1110
  %vm1139 = vcmp.eq.s32.totalorder %v30, %v1106
  %vm1140 = vcmp.eq.s32.totalorder %v30, %v1110
  %vm1141 = vcmp.eq.s32.totalorder %v31, %v1106
  %vm1142 = vcmp.eq.s32.totalorder %v31, %v1110
  %vm1143 = vcmp.eq.s32.totalorder %v32, %v1106
  %vm1144 = vcmp.eq.s32.totalorder %v32, %v1110
  %vm1145 = vcmp.eq.s32.totalorder %v33, %v1106
  %vm1146 = vcmp.eq.s32.totalorder %v33, %v1110
  %vm1147 = vcmp.eq.s32.totalorder %v34, %v1106
  %vm1148 = vcmp.eq.s32.totalorder %v34, %v1110
  %vm1149 = vcmp.eq.s32.totalorder %v35, %v1106
  %vm1150 = vcmp.eq.s32.totalorder %v35, %v1110
  %vm1151 = vcmp.eq.s32.totalorder %v36, %v1106
  %vm1152 = vcmp.eq.s32.totalorder %v36, %v1110
  %vm1153 = vcmp.eq.s32.totalorder %v37, %v1106
  %vm1154 = vcmp.eq.s32.totalorder %v37, %v1110
  %vm1155 = vcmp.eq.s32.totalorder %v38, %v1106
  %vm1156 = vcmp.eq.s32.totalorder %v38, %v1110
  %vm1157 = vcmp.eq.s32.totalorder %v39, %v1106
  %vm1158 = vcmp.eq.s32.totalorder %v39, %v1110
  %vm1159 = vcmp.eq.s32.totalorder %v40, %v1106
  %vm1160 = vcmp.eq.s32.totalorder %v40, %v1110
  %vm1161 = vcmp.eq.s32.totalorder %v41, %v1106
  %vm1162 = vcmp.eq.s32.totalorder %v41, %v1110
  %vm1163 = vcmp.eq.s32.totalorder %v42, %v1106
  %vm1164 = vcmp.eq.s32.totalorder %v42, %v1110
  %vm1165 = vcmp.eq.s32.totalorder %v43, %v1106
  %vm1166 = vcmp.eq.s32.totalorder %v43, %v1110
  %vm1167 = vcmp.eq.s32.totalorder %v44, %v1106
  %vm1168 = vcmp.eq.s32.totalorder %v44, %v1110
  %vm1169 = vcmp.eq.s32.totalorder %v45, %v1106
  %vm1170 = vcmp.eq.s32.totalorder %v45, %v1110
  %vm1171 = vcmp.eq.s32.totalorder %v46, %v1106
  %vm1172 = vcmp.eq.s32.totalorder %v46, %v1110
  %vm1173 = vcmp.eq.s32.totalorder %v47, %v1106
  %vm1174 = vcmp.eq.s32.totalorder %v47, %v1110
  %v1176 = vlaneseq
  %v1177 = vshrl.u32 %v1176, 7
  %v1178 = vsub.s32 0, %v1177
  %v1179 = vrot.slane %v1067, %v1178
  %v1180 = vlaneseq
  %v1181 = vshrl.u32 %v1180, 7
  %v1182 = vsub.s32 2, %v1181
  %v1183 = vrot.slane %v1067, %v1182
  %v1186 = vlaneseq
  %v1187 = vshrl.u32 %v1186, 7
  %v1188 = vsub.s32 0, %v1187
  %v1189 = vrot.slane %v1179, %v1188
  %v1190 = vlaneseq
  %v1191 = vshrl.u32 %v1190, 7
  %v1192 = vsub.s32 0, %v1191
  %v1193 = vrot.slane %v1183, %v1192
  %v1194 = vsel %vm1111, %v1189, 0.0
  %v1195 = vsel %vm1112, %v1193, 0.0
  %v1196 = vsel %vm1113, %v1189, 0.0
  %v1197 = vsel %vm1114, %v1193, 0.0
  %v1198 = vsel %vm1115, %v1189, 0.0
  %v1199 = vsel %vm1116, %v1193, 0.0
  %v1200 = vsel %vm1117, %v1189, 0.0
  %v1201 = vsel %vm1118, %v1193, 0.0
  %v1202 = vsel %vm1119, %v1189, 0.0
  %v1203 = vsel %vm1120, %v1193, 0.0
  %v1204 = vsel %vm1121, %v1189, 0.0
  %v1205 = vsel %vm1122, %v1193, 0.0
  %v1206 = vsel %vm1123, %v1189, 0.0
  %v1207 = vsel %vm1124, %v1193, 0.0
  %v1208 = vsel %vm1125, %v1189, 0.0
  %v1209 = vsel %vm1126, %v1193, 0.0
  %v1210 = vsel %vm1127, %v1189, 0.0
  %v1211 = vsel %vm1128, %v1193, 0.0
  %v1212 = vsel %vm1129, %v1189, 0.0
  %v1213 = vsel %vm1130, %v1193, 0.0
  %v1214 = vsel %vm1131, %v1189, 0.0
  %v1215 = vsel %vm1132, %v1193, 0.0
  %v1216 = vsel %vm1133, %v1189, 0.0
  %v1217 = vsel %vm1134, %v1193, 0.0
  %v1218 = vsel %vm1135, %v1189, 0.0
  %v1219 = vsel %vm1136, %v1193, 0.0
  %v1220 = vsel %vm1137, %v1189, 0.0
  %v1221 = vsel %vm1138, %v1193, 0.0
  %v1222 = vsel %vm1139, %v1189, 0.0
  %v1223 = vsel %vm1140, %v1193, 0.0
  %v1224 = vsel %vm1141, %v1189, 0.0
  %v1225 = vsel %vm1142, %v1193, 0.0
  %v1226 = vsel %vm1143, %v1189, 0.0
  %v1227 = vsel %vm1144, %v1193, 0.0
  %v1228 = vsel %vm1145, %v1189, 0.0
  %v1229 = vsel %vm1146, %v1193, 0.0
  %v1230 = vsel %vm1147, %v1189, 0.0
  %v1231 = vsel %vm1148, %v1193, 0.0
  %v1232 = vsel %vm1149, %v1189, 0.0
  %v1233 = vsel %vm1150, %v1193, 0.0
  %v1234 = vsel %vm1151, %v1189, 0.0
  %v1235 = vsel %vm1152, %v1193, 0.0
  %v1236 = vsel %vm1153, %v1189, 0.0
  %v1237 = vsel %vm1154, %v1193, 0.0
  %v1238 = vsel %vm1155, %v1189, 0.0
  %v1239 = vsel %vm1156, %v1193, 0.0
  %v1240 = vsel %vm1157, %v1189, 0.0
  %v1241 = vsel %vm1158, %v1193, 0.0
  %v1242 = vsel %vm1159, %v1189, 0.0
  %v1243 = vsel %vm1160, %v1193, 0.0
  %v1244 = vsel %vm1161, %v1189, 0.0
  %v1245 = vsel %vm1162, %v1193, 0.0
  %v1246 = vsel %vm1163, %v1189, 0.0
  %v1247 = vsel %vm1164, %v1193, 0.0
  %v1248 = vsel %vm1165, %v1189, 0.0
  %v1249 = vsel %vm1166, %v1193, 0.0
  %v1250 = vsel %vm1167, %v1189, 0.0
  %v1251 = vsel %vm1168, %v1193, 0.0
  %v1252 = vsel %vm1169, %v1189, 0.0
  %v1253 = vsel %vm1170, %v1193, 0.0
  %v1254 = vsel %vm1171, %v1189, 0.0
  %v1255 = vsel %vm1172, %v1193, 0.0
  %v1256 = vsel %vm1173, %v1189, 0.0
  %v1257 = vsel %vm1174, %v1193, 0.0
  %v1258 = vlaneseq
  %v1259 = vshrl.u32 %v1258, 7
  %v1260 = vsub.s32 0, %v1259
  %v1261 = vrot.slane %v1091, %v1260
  %v1262 = vlaneseq
  %v1263 = vshrl.u32 %v1262, 7
  %v1264 = vsub.s32 2, %v1263
  %v1265 = vrot.slane %v1091, %v1264
  %v1266 = vlaneseq
  %v1267 = vshrl.u32 %v1266, 7
  %v1268 = vsub.s32 0, %v1267
  %v1269 = vrot.slane %v1261, %v1268
  %v1270 = vlaneseq
  %v1271 = vshrl.u32 %v1270, 7
  %v1272 = vsub.s32 0, %v1271
  %v1273 = vrot.slane %v1265, %v1272
  %vm1274 = vcmp.eq.s32.totalorder %v16, %v1269
  %vm1275 = vcmp.eq.s32.totalorder %v16, %v1273
  %vm1276 = vcmp.eq.s32.totalorder %v17, %v1269
  %vm1277 = vcmp.eq.s32.totalorder %v17, %v1273
  %vm1278 = vcmp.eq.s32.totalorder %v18, %v1269
  %vm1279 = vcmp.eq.s32.totalorder %v18, %v1273
  %vm1280 = vcmp.eq.s32.totalorder %v19, %v1269
  %vm1281 = vcmp.eq.s32.totalorder %v19, %v1273
  %vm1282 = vcmp.eq.s32.totalorder %v20, %v1269
  %vm1283 = vcmp.eq.s32.totalorder %v20, %v1273
  %vm1284 = vcmp.eq.s32.totalorder %v21, %v1269
  %vm1285 = vcmp.eq.s32.totalorder %v21, %v1273
  %vm1286 = vcmp.eq.s32.totalorder %v22, %v1269
  %vm1287 = vcmp.eq.s32.totalorder %v22, %v1273
  %vm1288 = vcmp.eq.s32.totalorder %v23, %v1269
  %vm1289 = vcmp.eq.s32.totalorder %v23, %v1273
  %vm1290 = vcmp.eq.s32.totalorder %v24, %v1269
  %vm1291 = vcmp.eq.s32.totalorder %v24, %v1273
  %vm1292 = vcmp.eq.s32.totalorder %v25, %v1269
  %vm1293 = vcmp.eq.s32.totalorder %v25, %v1273
  %vm1294 = vcmp.eq.s32.totalorder %v26, %v1269
  %vm1295 = vcmp.eq.s32.totalorder %v26, %v1273
  %vm1296 = vcmp.eq.s32.totalorder %v27, %v1269
  %vm1297 = vcmp.eq.s32.totalorder %v27, %v1273
  %vm1298 = vcmp.eq.s32.totalorder %v28, %v1269
  %vm1299 = vcmp.eq.s32.totalorder %v28, %v1273
  %vm1300 = vcmp.eq.s32.totalorder %v29, %v1269
  %vm1301 = vcmp.eq.s32.totalorder %v29, %v1273
  %vm1302 = vcmp.eq.s32.totalorder %v30, %v1269
  %vm1303 = vcmp.eq.s32.totalorder %v30, %v1273
  %vm1304 = vcmp.eq.s32.totalorder %v31, %v1269
  %vm1305 = vcmp.eq.s32.totalorder %v31, %v1273
  %vm1306 = vcmp.eq.s32.totalorder %v32, %v1269
  %vm1307 = vcmp.eq.s32.totalorder %v32, %v1273
  %vm1308 = vcmp.eq.s32.totalorder %v33, %v1269
  %vm1309 = vcmp.eq.s32.totalorder %v33, %v1273
  %vm1310 = vcmp.eq.s32.totalorder %v34, %v1269
  %vm1311 = vcmp.eq.s32.totalorder %v34, %v1273
  %vm1312 = vcmp.eq.s32.totalorder %v35, %v1269
  %vm1313 = vcmp.eq.s32.totalorder %v35, %v1273
  %vm1314 = vcmp.eq.s32.totalorder %v36, %v1269
  %vm1315 = vcmp.eq.s32.totalorder %v36, %v1273
  %vm1316 = vcmp.eq.s32.totalorder %v37, %v1269
  %vm1317 = vcmp.eq.s32.totalorder %v37, %v1273
  %vm1318 = vcmp.eq.s32.totalorder %v38, %v1269
  %vm1319 = vcmp.eq.s32.totalorder %v38, %v1273
  %vm1320 = vcmp.eq.s32.totalorder %v39, %v1269
  %vm1321 = vcmp.eq.s32.totalorder %v39, %v1273
  %vm1322 = vcmp.eq.s32.totalorder %v40, %v1269
  %vm1323 = vcmp.eq.s32.totalorder %v40, %v1273
  %vm1324 = vcmp.eq.s32.totalorder %v41, %v1269
  %vm1325 = vcmp.eq.s32.totalorder %v41, %v1273
  %vm1326 = vcmp.eq.s32.totalorder %v42, %v1269
  %vm1327 = vcmp.eq.s32.totalorder %v42, %v1273
  %vm1328 = vcmp.eq.s32.totalorder %v43, %v1269
  %vm1329 = vcmp.eq.s32.totalorder %v43, %v1273
  %vm1330 = vcmp.eq.s32.totalorder %v44, %v1269
  %vm1331 = vcmp.eq.s32.totalorder %v44, %v1273
  %vm1332 = vcmp.eq.s32.totalorder %v45, %v1269
  %vm1333 = vcmp.eq.s32.totalorder %v45, %v1273
  %vm1334 = vcmp.eq.s32.totalorder %v46, %v1269
  %vm1335 = vcmp.eq.s32.totalorder %v46, %v1273
  %vm1336 = vcmp.eq.s32.totalorder %v47, %v1269
  %vm1337 = vcmp.eq.s32.totalorder %v47, %v1273
  %v1339 = vlaneseq
  %v1340 = vshrl.u32 %v1339, 7
  %v1341 = vsub.s32 0, %v1340
  %v1342 = vrot.slane %v1078, %v1341
  %v1343 = vlaneseq
  %v1344 = vshrl.u32 %v1343, 7
  %v1345 = vsub.s32 2, %v1344
  %v1346 = vrot.slane %v1078, %v1345
  %v1349 = vlaneseq
  %v1350 = vshrl.u32 %v1349, 7
  %v1351 = vsub.s32 0, %v1350
  %v1352 = vrot.slane %v1342, %v1351
  %v1353 = vlaneseq
  %v1354 = vshrl.u32 %v1353, 7
  %v1355 = vsub.s32 0, %v1354
  %v1356 = vrot.slane %v1346, %v1355
  %v1357 = vsel %vm1274, %v1352, 0.0
  %v1358 = vsel %vm1275, %v1356, 0.0
  %v1359 = vsel %vm1276, %v1352, 0.0
  %v1360 = vsel %vm1277, %v1356, 0.0
  %v1361 = vsel %vm1278, %v1352, 0.0
  %v1362 = vsel %vm1279, %v1356, 0.0
  %v1363 = vsel %vm1280, %v1352, 0.0
  %v1364 = vsel %vm1281, %v1356, 0.0
  %v1365 = vsel %vm1282, %v1352, 0.0
  %v1366 = vsel %vm1283, %v1356, 0.0
  %v1367 = vsel %vm1284, %v1352, 0.0
  %v1368 = vsel %vm1285, %v1356, 0.0
  %v1369 = vsel %vm1286, %v1352, 0.0
  %v1370 = vsel %vm1287, %v1356, 0.0
  %v1371 = vsel %vm1288, %v1352, 0.0
  %v1372 = vsel %vm1289, %v1356, 0.0
  %v1373 = vsel %vm1290, %v1352, 0.0
  %v1374 = vsel %vm1291, %v1356, 0.0
  %v1375 = vsel %vm1292, %v1352, 0.0
  %v1376 = vsel %vm1293, %v1356, 0.0
  %v1377 = vsel %vm1294, %v1352, 0.0
  %v1378 = vsel %vm1295, %v1356, 0.0
  %v1379 = vsel %vm1296, %v1352, 0.0
  %v1380 = vsel %vm1297, %v1356, 0.0
  %v1381 = vsel %vm1298, %v1352, 0.0
  %v1382 = vsel %vm1299, %v1356, 0.0
  %v1383 = vsel %vm1300, %v1352, 0.0
  %v1384 = vsel %vm1301, %v1356, 0.0
  %v1385 = vsel %vm1302, %v1352, 0.0
  %v1386 = vsel %vm1303, %v1356, 0.0
  %v1387 = vsel %vm1304, %v1352, 0.0
  %v1388 = vsel %vm1305, %v1356, 0.0
  %v1389 = vsel %vm1306, %v1352, 0.0
  %v1390 = vsel %vm1307, %v1356, 0.0
  %v1391 = vsel %vm1308, %v1352, 0.0
  %v1392 = vsel %vm1309, %v1356, 0.0
  %v1393 = vsel %vm1310, %v1352, 0.0
  %v1394 = vsel %vm1311, %v1356, 0.0
  %v1395 = vsel %vm1312, %v1352, 0.0
  %v1396 = vsel %vm1313, %v1356, 0.0
  %v1397 = vsel %vm1314, %v1352, 0.0
  %v1398 = vsel %vm1315, %v1356, 0.0
  %v1399 = vsel %vm1316, %v1352, 0.0
  %v1400 = vsel %vm1317, %v1356, 0.0
  %v1401 = vsel %vm1318, %v1352, 0.0
  %v1402 = vsel %vm1319, %v1356, 0.0
  %v1403 = vsel %vm1320, %v1352, 0.0
  %v1404 = vsel %vm1321, %v1356, 0.0
  %v1405 = vsel %vm1322, %v1352, 0.0
  %v1406 = vsel %vm1323, %v1356, 0.0
  %v1407 = vsel %vm1324, %v1352, 0.0
  %v1408 = vsel %vm1325, %v1356, 0.0
  %v1409 = vsel %vm1326, %v1352, 0.0
  %v1410 = vsel %vm1327, %v1356, 0.0
  %v1411 = vsel %vm1328, %v1352, 0.0
  %v1412 = vsel %vm1329, %v1356, 0.0
  %v1413 = vsel %vm1330, %v1352, 0.0
  %v1414 = vsel %vm1331, %v1356, 0.0
  %v1415 = vsel %vm1332, %v1352, 0.0
  %v1416 = vsel %vm1333, %v1356, 0.0
  %v1417 = vsel %vm1334, %v1352, 0.0
  %v1418 = vsel %vm1335, %v1356, 0.0
  %v1419 = vsel %vm1336, %v1352, 0.0
  %v1420 = vsel %vm1337, %v1356, 0.0
  %v1421 = vadd.f32 %v1194, %v1357
  %v1422 = vadd.f32 %v1195, %v1358
  %v1423 = vadd.f32 %v1196, %v1359
  %v1424 = vadd.f32 %v1197, %v1360
  %v1425 = vadd.f32 %v1198, %v1361
  %v1426 = vadd.f32 %v1199, %v1362
  %v1427 = vadd.f32 %v1200, %v1363
  %v1428 = vadd.f32 %v1201, %v1364
  %v1429 = vadd.f32 %v1202, %v1365
  %v1430 = vadd.f32 %v1203, %v1366
  %v1431 = vadd.f32 %v1204, %v1367
  %v1432 = vadd.f32 %v1205, %v1368
  %v1433 = vadd.f32 %v1206, %v1369
  %v1434 = vadd.f32 %v1207, %v1370
  %v1435 = vadd.f32 %v1208, %v1371
  %v1436 = vadd.f32 %v1209, %v1372
  %v1437 = vadd.f32 %v1210, %v1373
  %v1438 = vadd.f32 %v1211, %v1374
  %v1439 = vadd.f32 %v1212, %v1375
  %v1440 = vadd.f32 %v1213, %v1376
  %v1441 = vadd.f32 %v1214, %v1377
  %v1442 = vadd.f32 %v1215, %v1378
  %v1443 = vadd.f32 %v1216, %v1379
  %v1444 = vadd.f32 %v1217, %v1380
  %v1445 = vadd.f32 %v1218, %v1381
  %v1446 = vadd.f32 %v1219, %v1382
  %v1447 = vadd.f32 %v1220, %v1383
  %v1448 = vadd.f32 %v1221, %v1384
  %v1449 = vadd.f32 %v1222, %v1385
  %v1450 = vadd.f32 %v1223, %v1386
  %v1451 = vadd.f32 %v1224, %v1387
  %v1452 = vadd.f32 %v1225, %v1388
  %v1453 = vadd.f32 %v1226, %v1389
  %v1454 = vadd.f32 %v1227, %v1390
  %v1455 = vadd.f32 %v1228, %v1391
  %v1456 = vadd.f32 %v1229, %v1392
  %v1457 = vadd.f32 %v1230, %v1393
  %v1458 = vadd.f32 %v1231, %v1394
  %v1459 = vadd.f32 %v1232, %v1395
  %v1460 = vadd.f32 %v1233, %v1396
  %v1461 = vadd.f32 %v1234, %v1397
  %v1462 = vadd.f32 %v1235, %v1398
  %v1463 = vadd.f32 %v1236, %v1399
  %v1464 = vadd.f32 %v1237, %v1400
  %v1465 = vadd.f32 %v1238, %v1401
  %v1466 = vadd.f32 %v1239, %v1402
  %v1467 = vadd.f32 %v1240, %v1403
  %v1468 = vadd.f32 %v1241, %v1404
  %v1469 = vadd.f32 %v1242, %v1405
  %v1470 = vadd.f32 %v1243, %v1406
  %v1471 = vadd.f32 %v1244, %v1407
  %v1472 = vadd.f32 %v1245, %v1408
  %v1473 = vadd.f32 %v1246, %v1409
  %v1474 = vadd.f32 %v1247, %v1410
  %v1475 = vadd.f32 %v1248, %v1411
  %v1476 = vadd.f32 %v1249, %v1412
  %v1477 = vadd.f32 %v1250, %v1413
  %v1478 = vadd.f32 %v1251, %v1414
  %v1479 = vadd.f32 %v1252, %v1415
  %v1480 = vadd.f32 %v1253, %v1416
  %v1481 = vadd.f32 %v1254, %v1417
  %v1482 = vadd.f32 %v1255, %v1418
  %v1483 = vadd.f32 %v1256, %v1419
  %v1484 = vadd.f32 %v1257, %v1420
  %v1485 = vlaneseq
  %v1486 = vshrl.u32 %v1485, 7
  %v1487 = vsub.s32 0, %v1486
  %v1488 = vrot.slane %v1093, %v1487
  %v1489 = vlaneseq
  %v1490 = vshrl.u32 %v1489, 7
  %v1491 = vsub.s32 2, %v1490
  %v1492 = vrot.slane %v1093, %v1491
  %v1493 = vlaneseq
  %v1494 = vshrl.u32 %v1493, 7
  %v1495 = vsub.s32 0, %v1494
  %v1496 = vrot.slane %v1488, %v1495
  %v1497 = vlaneseq
  %v1498 = vshrl.u32 %v1497, 7
  %v1499 = vsub.s32 0, %v1498
  %v1500 = vrot.slane %v1492, %v1499
  %vm1501 = vcmp.eq.s32.totalorder %v16, %v1496
  %vm1502 = vcmp.eq.s32.totalorder %v16, %v1500
  %vm1503 = vcmp.eq.s32.totalorder %v17, %v1496
  %vm1504 = vcmp.eq.s32.totalorder %v17, %v1500
  %vm1505 = vcmp.eq.s32.totalorder %v18, %v1496
  %vm1506 = vcmp.eq.s32.totalorder %v18, %v1500
  %vm1507 = vcmp.eq.s32.totalorder %v19, %v1496
  %vm1508 = vcmp.eq.s32.totalorder %v19, %v1500
  %vm1509 = vcmp.eq.s32.totalorder %v20, %v1496
  %vm1510 = vcmp.eq.s32.totalorder %v20, %v1500
  %vm1511 = vcmp.eq.s32.totalorder %v21, %v1496
  %vm1512 = vcmp.eq.s32.totalorder %v21, %v1500
  %vm1513 = vcmp.eq.s32.totalorder %v22, %v1496
  %vm1514 = vcmp.eq.s32.totalorder %v22, %v1500
  %vm1515 = vcmp.eq.s32.totalorder %v23, %v1496
  %vm1516 = vcmp.eq.s32.totalorder %v23, %v1500
  %vm1517 = vcmp.eq.s32.totalorder %v24, %v1496
  %vm1518 = vcmp.eq.s32.totalorder %v24, %v1500
  %vm1519 = vcmp.eq.s32.totalorder %v25, %v1496
  %vm1520 = vcmp.eq.s32.totalorder %v25, %v1500
  %vm1521 = vcmp.eq.s32.totalorder %v26, %v1496
  %vm1522 = vcmp.eq.s32.totalorder %v26, %v1500
  %vm1523 = vcmp.eq.s32.totalorder %v27, %v1496
  %vm1524 = vcmp.eq.s32.totalorder %v27, %v1500
  %vm1525 = vcmp.eq.s32.totalorder %v28, %v1496
  %vm1526 = vcmp.eq.s32.totalorder %v28, %v1500
  %vm1527 = vcmp.eq.s32.totalorder %v29, %v1496
  %vm1528 = vcmp.eq.s32.totalorder %v29, %v1500
  %vm1529 = vcmp.eq.s32.totalorder %v30, %v1496
  %vm1530 = vcmp.eq.s32.totalorder %v30, %v1500
  %vm1531 = vcmp.eq.s32.totalorder %v31, %v1496
  %vm1532 = vcmp.eq.s32.totalorder %v31, %v1500
  %vm1533 = vcmp.eq.s32.totalorder %v32, %v1496
  %vm1534 = vcmp.eq.s32.totalorder %v32, %v1500
  %vm1535 = vcmp.eq.s32.totalorder %v33, %v1496
  %vm1536 = vcmp.eq.s32.totalorder %v33, %v1500
  %vm1537 = vcmp.eq.s32.totalorder %v34, %v1496
  %vm1538 = vcmp.eq.s32.totalorder %v34, %v1500
  %vm1539 = vcmp.eq.s32.totalorder %v35, %v1496
  %vm1540 = vcmp.eq.s32.totalorder %v35, %v1500
  %vm1541 = vcmp.eq.s32.totalorder %v36, %v1496
  %vm1542 = vcmp.eq.s32.totalorder %v36, %v1500
  %vm1543 = vcmp.eq.s32.totalorder %v37, %v1496
  %vm1544 = vcmp.eq.s32.totalorder %v37, %v1500
  %vm1545 = vcmp.eq.s32.totalorder %v38, %v1496
  %vm1546 = vcmp.eq.s32.totalorder %v38, %v1500
  %vm1547 = vcmp.eq.s32.totalorder %v39, %v1496
  %vm1548 = vcmp.eq.s32.totalorder %v39, %v1500
  %vm1549 = vcmp.eq.s32.totalorder %v40, %v1496
  %vm1550 = vcmp.eq.s32.totalorder %v40, %v1500
  %vm1551 = vcmp.eq.s32.totalorder %v41, %v1496
  %vm1552 = vcmp.eq.s32.totalorder %v41, %v1500
  %vm1553 = vcmp.eq.s32.totalorder %v42, %v1496
  %vm1554 = vcmp.eq.s32.totalorder %v42, %v1500
  %vm1555 = vcmp.eq.s32.totalorder %v43, %v1496
  %vm1556 = vcmp.eq.s32.totalorder %v43, %v1500
  %vm1557 = vcmp.eq.s32.totalorder %v44, %v1496
  %vm1558 = vcmp.eq.s32.totalorder %v44, %v1500
  %vm1559 = vcmp.eq.s32.totalorder %v45, %v1496
  %vm1560 = vcmp.eq.s32.totalorder %v45, %v1500
  %vm1561 = vcmp.eq.s32.totalorder %v46, %v1496
  %vm1562 = vcmp.eq.s32.totalorder %v46, %v1500
  %vm1563 = vcmp.eq.s32.totalorder %v47, %v1496
  %vm1564 = vcmp.eq.s32.totalorder %v47, %v1500
  %v1566 = vlaneseq
  %v1567 = vshrl.u32 %v1566, 7
  %v1568 = vsub.s32 0, %v1567
  %v1569 = vrot.slane %v1081, %v1568
  %v1570 = vlaneseq
  %v1571 = vshrl.u32 %v1570, 7
  %v1572 = vsub.s32 2, %v1571
  %v1573 = vrot.slane %v1081, %v1572
  %v1576 = vlaneseq
  %v1577 = vshrl.u32 %v1576, 7
  %v1578 = vsub.s32 0, %v1577
  %v1579 = vrot.slane %v1569, %v1578
  %v1580 = vlaneseq
  %v1581 = vshrl.u32 %v1580, 7
  %v1582 = vsub.s32 0, %v1581
  %v1583 = vrot.slane %v1573, %v1582
  %v1584 = vsel %vm1501, %v1579, 0.0
  %v1585 = vsel %vm1502, %v1583, 0.0
  %v1586 = vsel %vm1503, %v1579, 0.0
  %v1587 = vsel %vm1504, %v1583, 0.0
  %v1588 = vsel %vm1505, %v1579, 0.0
  %v1589 = vsel %vm1506, %v1583, 0.0
  %v1590 = vsel %vm1507, %v1579, 0.0
  %v1591 = vsel %vm1508, %v1583, 0.0
  %v1592 = vsel %vm1509, %v1579, 0.0
  %v1593 = vsel %vm1510, %v1583, 0.0
  %v1594 = vsel %vm1511, %v1579, 0.0
  %v1595 = vsel %vm1512, %v1583, 0.0
  %v1596 = vsel %vm1513, %v1579, 0.0
  %v1597 = vsel %vm1514, %v1583, 0.0
  %v1598 = vsel %vm1515, %v1579, 0.0
  %v1599 = vsel %vm1516, %v1583, 0.0
  %v1600 = vsel %vm1517, %v1579, 0.0
  %v1601 = vsel %vm1518, %v1583, 0.0
  %v1602 = vsel %vm1519, %v1579, 0.0
  %v1603 = vsel %vm1520, %v1583, 0.0
  %v1604 = vsel %vm1521, %v1579, 0.0
  %v1605 = vsel %vm1522, %v1583, 0.0
  %v1606 = vsel %vm1523, %v1579, 0.0
  %v1607 = vsel %vm1524, %v1583, 0.0
  %v1608 = vsel %vm1525, %v1579, 0.0
  %v1609 = vsel %vm1526, %v1583, 0.0
  %v1610 = vsel %vm1527, %v1579, 0.0
  %v1611 = vsel %vm1528, %v1583, 0.0
  %v1612 = vsel %vm1529, %v1579, 0.0
  %v1613 = vsel %vm1530, %v1583, 0.0
  %v1614 = vsel %vm1531, %v1579, 0.0
  %v1615 = vsel %vm1532, %v1583, 0.0
  %v1616 = vsel %vm1533, %v1579, 0.0
  %v1617 = vsel %vm1534, %v1583, 0.0
  %v1618 = vsel %vm1535, %v1579, 0.0
  %v1619 = vsel %vm1536, %v1583, 0.0
  %v1620 = vsel %vm1537, %v1579, 0.0
  %v1621 = vsel %vm1538, %v1583, 0.0
  %v1622 = vsel %vm1539, %v1579, 0.0
  %v1623 = vsel %vm1540, %v1583, 0.0
  %v1624 = vsel %vm1541, %v1579, 0.0
  %v1625 = vsel %vm1542, %v1583, 0.0
  %v1626 = vsel %vm1543, %v1579, 0.0
  %v1627 = vsel %vm1544, %v1583, 0.0
  %v1628 = vsel %vm1545, %v1579, 0.0
  %v1629 = vsel %vm1546, %v1583, 0.0
  %v1630 = vsel %vm1547, %v1579, 0.0
  %v1631 = vsel %vm1548, %v1583, 0.0
  %v1632 = vsel %vm1549, %v1579, 0.0
  %v1633 = vsel %vm1550, %v1583, 0.0
  %v1634 = vsel %vm1551, %v1579, 0.0
  %v1635 = vsel %vm1552, %v1583, 0.0
  %v1636 = vsel %vm1553, %v1579, 0.0
  %v1637 = vsel %vm1554, %v1583, 0.0
  %v1638 = vsel %vm1555, %v1579, 0.0
  %v1639 = vsel %vm1556, %v1583, 0.0
  %v1640 = vsel %vm1557, %v1579, 0.0
  %v1641 = vsel %vm1558, %v1583, 0.0
  %v1642 = vsel %vm1559, %v1579, 0.0
  %v1643 = vsel %vm1560, %v1583, 0.0
  %v1644 = vsel %vm1561, %v1579, 0.0
  %v1645 = vsel %vm1562, %v1583, 0.0
  %v1646 = vsel %vm1563, %v1579, 0.0
  %v1647 = vsel %vm1564, %v1583, 0.0
  %v1648 = vadd.f32 %v1421, %v1584
  %v1649 = vadd.f32 %v1422, %v1585
  %v1650 = vadd.f32 %v1423, %v1586
  %v1651 = vadd.f32 %v1424, %v1587
  %v1652 = vadd.f32 %v1425, %v1588
  %v1653 = vadd.f32 %v1426, %v1589
  %v1654 = vadd.f32 %v1427, %v1590
  %v1655 = vadd.f32 %v1428, %v1591
  %v1656 = vadd.f32 %v1429, %v1592
  %v1657 = vadd.f32 %v1430, %v1593
  %v1658 = vadd.f32 %v1431, %v1594
  %v1659 = vadd.f32 %v1432, %v1595
  %v1660 = vadd.f32 %v1433, %v1596
  %v1661 = vadd.f32 %v1434, %v1597
  %v1662 = vadd.f32 %v1435, %v1598
  %v1663 = vadd.f32 %v1436, %v1599
  %v1664 = vadd.f32 %v1437, %v1600
  %v1665 = vadd.f32 %v1438, %v1601
  %v1666 = vadd.f32 %v1439, %v1602
  %v1667 = vadd.f32 %v1440, %v1603
  %v1668 = vadd.f32 %v1441, %v1604
  %v1669 = vadd.f32 %v1442, %v1605
  %v1670 = vadd.f32 %v1443, %v1606
  %v1671 = vadd.f32 %v1444, %v1607
  %v1672 = vadd.f32 %v1445, %v1608
  %v1673 = vadd.f32 %v1446, %v1609
  %v1674 = vadd.f32 %v1447, %v1610
  %v1675 = vadd.f32 %v1448, %v1611
  %v1676 = vadd.f32 %v1449, %v1612
  %v1677 = vadd.f32 %v1450, %v1613
  %v1678 = vadd.f32 %v1451, %v1614
  %v1679 = vadd.f32 %v1452, %v1615
  %v1680 = vadd.f32 %v1453, %v1616
  %v1681 = vadd.f32 %v1454, %v1617
  %v1682 = vadd.f32 %v1455, %v1618
  %v1683 = vadd.f32 %v1456, %v1619
  %v1684 = vadd.f32 %v1457, %v1620
  %v1685 = vadd.f32 %v1458, %v1621
  %v1686 = vadd.f32 %v1459, %v1622
  %v1687 = vadd.f32 %v1460, %v1623
  %v1688 = vadd.f32 %v1461, %v1624
  %v1689 = vadd.f32 %v1462, %v1625
  %v1690 = vadd.f32 %v1463, %v1626
  %v1691 = vadd.f32 %v1464, %v1627
  %v1692 = vadd.f32 %v1465, %v1628
  %v1693 = vadd.f32 %v1466, %v1629
  %v1694 = vadd.f32 %v1467, %v1630
  %v1695 = vadd.f32 %v1468, %v1631
  %v1696 = vadd.f32 %v1469, %v1632
  %v1697 = vadd.f32 %v1470, %v1633
  %v1698 = vadd.f32 %v1471, %v1634
  %v1699 = vadd.f32 %v1472, %v1635
  %v1700 = vadd.f32 %v1473, %v1636
  %v1701 = vadd.f32 %v1474, %v1637
  %v1702 = vadd.f32 %v1475, %v1638
  %v1703 = vadd.f32 %v1476, %v1639
  %v1704 = vadd.f32 %v1477, %v1640
  %v1705 = vadd.f32 %v1478, %v1641
  %v1706 = vadd.f32 %v1479, %v1642
  %v1707 = vadd.f32 %v1480, %v1643
  %v1708 = vadd.f32 %v1481, %v1644
  %v1709 = vadd.f32 %v1482, %v1645
  %v1710 = vadd.f32 %v1483, %v1646
  %v1711 = vadd.f32 %v1484, %v1647
  %v1712 = vlaneseq
  %v1713 = vshrl.u32 %v1712, 7
  %v1714 = vsub.s32 0, %v1713
  %v1715 = vrot.slane %v1094, %v1714
  %v1716 = vlaneseq
  %v1717 = vshrl.u32 %v1716, 7
  %v1718 = vsub.s32 2, %v1717
  %v1719 = vrot.slane %v1094, %v1718
  %v1720 = vlaneseq
  %v1721 = vshrl.u32 %v1720, 7
  %v1722 = vsub.s32 0, %v1721
  %v1723 = vrot.slane %v1715, %v1722
  %v1724 = vlaneseq
  %v1725 = vshrl.u32 %v1724, 7
  %v1726 = vsub.s32 0, %v1725
  %v1727 = vrot.slane %v1719, %v1726
  %vm1728 = vcmp.eq.s32.totalorder %v16, %v1723
  %vm1729 = vcmp.eq.s32.totalorder %v16, %v1727
  %vm1730 = vcmp.eq.s32.totalorder %v17, %v1723
  %vm1731 = vcmp.eq.s32.totalorder %v17, %v1727
  %vm1732 = vcmp.eq.s32.totalorder %v18, %v1723
  %vm1733 = vcmp.eq.s32.totalorder %v18, %v1727
  %vm1734 = vcmp.eq.s32.totalorder %v19, %v1723
  %vm1735 = vcmp.eq.s32.totalorder %v19, %v1727
  %vm1736 = vcmp.eq.s32.totalorder %v20, %v1723
  %vm1737 = vcmp.eq.s32.totalorder %v20, %v1727
  %vm1738 = vcmp.eq.s32.totalorder %v21, %v1723
  %vm1739 = vcmp.eq.s32.totalorder %v21, %v1727
  %vm1740 = vcmp.eq.s32.totalorder %v22, %v1723
  %vm1741 = vcmp.eq.s32.totalorder %v22, %v1727
  %vm1742 = vcmp.eq.s32.totalorder %v23, %v1723
  %vm1743 = vcmp.eq.s32.totalorder %v23, %v1727
  %vm1744 = vcmp.eq.s32.totalorder %v24, %v1723
  %vm1745 = vcmp.eq.s32.totalorder %v24, %v1727
  %vm1746 = vcmp.eq.s32.totalorder %v25, %v1723
  %vm1747 = vcmp.eq.s32.totalorder %v25, %v1727
  %vm1748 = vcmp.eq.s32.totalorder %v26, %v1723
  %vm1749 = vcmp.eq.s32.totalorder %v26, %v1727
  %vm1750 = vcmp.eq.s32.totalorder %v27, %v1723
  %vm1751 = vcmp.eq.s32.totalorder %v27, %v1727
  %vm1752 = vcmp.eq.s32.totalorder %v28, %v1723
  %vm1753 = vcmp.eq.s32.totalorder %v28, %v1727
  %vm1754 = vcmp.eq.s32.totalorder %v29, %v1723
  %vm1755 = vcmp.eq.s32.totalorder %v29, %v1727
  %vm1756 = vcmp.eq.s32.totalorder %v30, %v1723
  %vm1757 = vcmp.eq.s32.totalorder %v30, %v1727
  %vm1758 = vcmp.eq.s32.totalorder %v31, %v1723
  %vm1759 = vcmp.eq.s32.totalorder %v31, %v1727
  %vm1760 = vcmp.eq.s32.totalorder %v32, %v1723
  %vm1761 = vcmp.eq.s32.totalorder %v32, %v1727
  %vm1762 = vcmp.eq.s32.totalorder %v33, %v1723
  %vm1763 = vcmp.eq.s32.totalorder %v33, %v1727
  %vm1764 = vcmp.eq.s32.totalorder %v34, %v1723
  %vm1765 = vcmp.eq.s32.totalorder %v34, %v1727
  %vm1766 = vcmp.eq.s32.totalorder %v35, %v1723
  %vm1767 = vcmp.eq.s32.totalorder %v35, %v1727
  %vm1768 = vcmp.eq.s32.totalorder %v36, %v1723
  %vm1769 = vcmp.eq.s32.totalorder %v36, %v1727
  %vm1770 = vcmp.eq.s32.totalorder %v37, %v1723
  %vm1771 = vcmp.eq.s32.totalorder %v37, %v1727
  %vm1772 = vcmp.eq.s32.totalorder %v38, %v1723
  %vm1773 = vcmp.eq.s32.totalorder %v38, %v1727
  %vm1774 = vcmp.eq.s32.totalorder %v39, %v1723
  %vm1775 = vcmp.eq.s32.totalorder %v39, %v1727
  %vm1776 = vcmp.eq.s32.totalorder %v40, %v1723
  %vm1777 = vcmp.eq.s32.totalorder %v40, %v1727
  %vm1778 = vcmp.eq.s32.totalorder %v41, %v1723
  %vm1779 = vcmp.eq.s32.totalorder %v41, %v1727
  %vm1780 = vcmp.eq.s32.totalorder %v42, %v1723
  %vm1781 = vcmp.eq.s32.totalorder %v42, %v1727
  %vm1782 = vcmp.eq.s32.totalorder %v43, %v1723
  %vm1783 = vcmp.eq.s32.totalorder %v43, %v1727
  %vm1784 = vcmp.eq.s32.totalorder %v44, %v1723
  %vm1785 = vcmp.eq.s32.totalorder %v44, %v1727
  %vm1786 = vcmp.eq.s32.totalorder %v45, %v1723
  %vm1787 = vcmp.eq.s32.totalorder %v45, %v1727
  %vm1788 = vcmp.eq.s32.totalorder %v46, %v1723
  %vm1789 = vcmp.eq.s32.totalorder %v46, %v1727
  %vm1790 = vcmp.eq.s32.totalorder %v47, %v1723
  %vm1791 = vcmp.eq.s32.totalorder %v47, %v1727
  %v1793 = vlaneseq
  %v1794 = vshrl.u32 %v1793, 7
  %v1795 = vsub.s32 0, %v1794
  %v1796 = vrot.slane %v1084, %v1795
  %v1797 = vlaneseq
  %v1798 = vshrl.u32 %v1797, 7
  %v1799 = vsub.s32 2, %v1798
  %v1800 = vrot.slane %v1084, %v1799
  %v1803 = vlaneseq
  %v1804 = vshrl.u32 %v1803, 7
  %v1805 = vsub.s32 0, %v1804
  %v1806 = vrot.slane %v1796, %v1805
  %v1807 = vlaneseq
  %v1808 = vshrl.u32 %v1807, 7
  %v1809 = vsub.s32 0, %v1808
  %v1810 = vrot.slane %v1800, %v1809
  %v1811 = vsel %vm1728, %v1806, 0.0
  %v1812 = vsel %vm1729, %v1810, 0.0
  %v1813 = vsel %vm1730, %v1806, 0.0
  %v1814 = vsel %vm1731, %v1810, 0.0
  %v1815 = vsel %vm1732, %v1806, 0.0
  %v1816 = vsel %vm1733, %v1810, 0.0
  %v1817 = vsel %vm1734, %v1806, 0.0
  %v1818 = vsel %vm1735, %v1810, 0.0
  %v1819 = vsel %vm1736, %v1806, 0.0
  %v1820 = vsel %vm1737, %v1810, 0.0
  %v1821 = vsel %vm1738, %v1806, 0.0
  %v1822 = vsel %vm1739, %v1810, 0.0
  %v1823 = vsel %vm1740, %v1806, 0.0
  %v1824 = vsel %vm1741, %v1810, 0.0
  %v1825 = vsel %vm1742, %v1806, 0.0
  %v1826 = vsel %vm1743, %v1810, 0.0
  %v1827 = vsel %vm1744, %v1806, 0.0
  %v1828 = vsel %vm1745, %v1810, 0.0
  %v1829 = vsel %vm1746, %v1806, 0.0
  %v1830 = vsel %vm1747, %v1810, 0.0
  %v1831 = vsel %vm1748, %v1806, 0.0
  %v1832 = vsel %vm1749, %v1810, 0.0
  %v1833 = vsel %vm1750, %v1806, 0.0
  %v1834 = vsel %vm1751, %v1810, 0.0
  %v1835 = vsel %vm1752, %v1806, 0.0
  %v1836 = vsel %vm1753, %v1810, 0.0
  %v1837 = vsel %vm1754, %v1806, 0.0
  %v1838 = vsel %vm1755, %v1810, 0.0
  %v1839 = vsel %vm1756, %v1806, 0.0
  %v1840 = vsel %vm1757, %v1810, 0.0
  %v1841 = vsel %vm1758, %v1806, 0.0
  %v1842 = vsel %vm1759, %v1810, 0.0
  %v1843 = vsel %vm1760, %v1806, 0.0
  %v1844 = vsel %vm1761, %v1810, 0.0
  %v1845 = vsel %vm1762, %v1806, 0.0
  %v1846 = vsel %vm1763, %v1810, 0.0
  %v1847 = vsel %vm1764, %v1806, 0.0
  %v1848 = vsel %vm1765, %v1810, 0.0
  %v1849 = vsel %vm1766, %v1806, 0.0
  %v1850 = vsel %vm1767, %v1810, 0.0
  %v1851 = vsel %vm1768, %v1806, 0.0
  %v1852 = vsel %vm1769, %v1810, 0.0
  %v1853 = vsel %vm1770, %v1806, 0.0
  %v1854 = vsel %vm1771, %v1810, 0.0
  %v1855 = vsel %vm1772, %v1806, 0.0
  %v1856 = vsel %vm1773, %v1810, 0.0
  %v1857 = vsel %vm1774, %v1806, 0.0
  %v1858 = vsel %vm1775, %v1810, 0.0
  %v1859 = vsel %vm1776, %v1806, 0.0
  %v1860 = vsel %vm1777, %v1810, 0.0
  %v1861 = vsel %vm1778, %v1806, 0.0
  %v1862 = vsel %vm1779, %v1810, 0.0
  %v1863 = vsel %vm1780, %v1806, 0.0
  %v1864 = vsel %vm1781, %v1810, 0.0
  %v1865 = vsel %vm1782, %v1806, 0.0
  %v1866 = vsel %vm1783, %v1810, 0.0
  %v1867 = vsel %vm1784, %v1806, 0.0
  %v1868 = vsel %vm1785, %v1810, 0.0
  %v1869 = vsel %vm1786, %v1806, 0.0
  %v1870 = vsel %vm1787, %v1810, 0.0
  %v1871 = vsel %vm1788, %v1806, 0.0
  %v1872 = vsel %vm1789, %v1810, 0.0
  %v1873 = vsel %vm1790, %v1806, 0.0
  %v1874 = vsel %vm1791, %v1810, 0.0
  %v1875 = vadd.f32 %v1648, %v1811
  %v1876 = vadd.f32 %v1649, %v1812
  %v1877 = vadd.f32 %v1650, %v1813
  %v1878 = vadd.f32 %v1651, %v1814
  %v1879 = vadd.f32 %v1652, %v1815
  %v1880 = vadd.f32 %v1653, %v1816
  %v1881 = vadd.f32 %v1654, %v1817
  %v1882 = vadd.f32 %v1655, %v1818
  %v1883 = vadd.f32 %v1656, %v1819
  %v1884 = vadd.f32 %v1657, %v1820
  %v1885 = vadd.f32 %v1658, %v1821
  %v1886 = vadd.f32 %v1659, %v1822
  %v1887 = vadd.f32 %v1660, %v1823
  %v1888 = vadd.f32 %v1661, %v1824
  %v1889 = vadd.f32 %v1662, %v1825
  %v1890 = vadd.f32 %v1663, %v1826
  %v1891 = vadd.f32 %v1664, %v1827
  %v1892 = vadd.f32 %v1665, %v1828
  %v1893 = vadd.f32 %v1666, %v1829
  %v1894 = vadd.f32 %v1667, %v1830
  %v1895 = vadd.f32 %v1668, %v1831
  %v1896 = vadd.f32 %v1669, %v1832
  %v1897 = vadd.f32 %v1670, %v1833
  %v1898 = vadd.f32 %v1671, %v1834
  %v1899 = vadd.f32 %v1672, %v1835
  %v1900 = vadd.f32 %v1673, %v1836
  %v1901 = vadd.f32 %v1674, %v1837
  %v1902 = vadd.f32 %v1675, %v1838
  %v1903 = vadd.f32 %v1676, %v1839
  %v1904 = vadd.f32 %v1677, %v1840
  %v1905 = vadd.f32 %v1678, %v1841
  %v1906 = vadd.f32 %v1679, %v1842
  %v1907 = vadd.f32 %v1680, %v1843
  %v1908 = vadd.f32 %v1681, %v1844
  %v1909 = vadd.f32 %v1682, %v1845
  %v1910 = vadd.f32 %v1683, %v1846
  %v1911 = vadd.f32 %v1684, %v1847
  %v1912 = vadd.f32 %v1685, %v1848
  %v1913 = vadd.f32 %v1686, %v1849
  %v1914 = vadd.f32 %v1687, %v1850
  %v1915 = vadd.f32 %v1688, %v1851
  %v1916 = vadd.f32 %v1689, %v1852
  %v1917 = vadd.f32 %v1690, %v1853
  %v1918 = vadd.f32 %v1691, %v1854
  %v1919 = vadd.f32 %v1692, %v1855
  %v1920 = vadd.f32 %v1693, %v1856
  %v1921 = vadd.f32 %v1694, %v1857
  %v1922 = vadd.f32 %v1695, %v1858
  %v1923 = vadd.f32 %v1696, %v1859
  %v1924 = vadd.f32 %v1697, %v1860
  %v1925 = vadd.f32 %v1698, %v1861
  %v1926 = vadd.f32 %v1699, %v1862
  %v1927 = vadd.f32 %v1700, %v1863
  %v1928 = vadd.f32 %v1701, %v1864
  %v1929 = vadd.f32 %v1702, %v1865
  %v1930 = vadd.f32 %v1703, %v1866
  %v1931 = vadd.f32 %v1704, %v1867
  %v1932 = vadd.f32 %v1705, %v1868
  %v1933 = vadd.f32 %v1706, %v1869
  %v1934 = vadd.f32 %v1707, %v1870
  %v1935 = vadd.f32 %v1708, %v1871
  %v1936 = vadd.f32 %v1709, %v1872
  %v1937 = vadd.f32 %v1710, %v1873
  %v1938 = vadd.f32 %v1711, %v1874
  %s1939 = scalar_lea.vmem %s2, 8
  %v1940 = vld [vmem:[%s1939] sm:$0xff]
  %v1942 = vcombine.high %v1940, %v1940
  %1944 = vmatprep.subr.mxu0 %v1906
  %1945 = vmatpush1.msra.mxu0 %v1905
  %1946 = vmatprep.subr.mxu0 %v1904
  %1947 = vmatpush1.msra.mxu0 %v1903
  %1948 = vmatprep.subr.mxu0 %v1902
  %1949 = vmatpush1.msra.mxu0 %v1901
  %1950 = vmatprep.subr.mxu0 %v1900
  %1951 = vmatpush1.msra.mxu0 %v1899
  %1952 = vmatprep.subr.mxu0 %v1898
  %1953 = vmatpush1.msra.mxu0 %v1897
  %1954 = vmatprep.subr.mxu0 %v1896
  %1955 = vmatpush1.msra.mxu0 %v1895
  %1956 = vmatprep.subr.mxu0 %v1894
  %1957 = vmatpush1.msra.mxu0 %v1893
  %1958 = vmatprep.subr.mxu0 %v1892
  %1959 = vmatpush1.msra.mxu0 %v1891
  %1960 = vmatprep.subr.mxu0 %v1890
  %1961 = vmatpush1.msra.mxu0 %v1889
  %1962 = vmatprep.subr.mxu0 %v1888
  %1963 = vmatpush1.msra.mxu0 %v1887
  %1964 = vmatprep.subr.mxu0 %v1886
  %1965 = vmatpush1.msra.mxu0 %v1885
  %1966 = vmatprep.subr.mxu0 %v1884
  %1967 = vmatpush1.msra.mxu0 %v1883
  %1968 = vmatprep.subr.mxu0 %v1882
  %1969 = vmatpush1.msra.mxu0 %v1881
  %1970 = vmatprep.subr.mxu0 %v1880
  %1971 = vmatpush1.msra.mxu0 %v1879
  %1972 = vmatprep.subr.mxu0 %v1878
  %1973 = vmatpush1.msra.mxu0 %v1877
  %1974 = vmatprep.subr.mxu0 %v1876
  %1975 = vmatpush1.msra.mxu0 %v1875
  %1976 = vmatprep.subr.mxu0 %v1938
  %1977 = vmatpush2.msra.mxu0 %v1937
  %1978 = vmatprep.subr.mxu0 %v1936
  %1979 = vmatpush2.msra.mxu0 %v1935
  %1980 = vmatprep.subr.mxu0 %v1934
  %1981 = vmatpush2.msra.mxu0 %v1933
  %1982 = vmatprep.subr.mxu0 %v1932
  %1983 = vmatpush2.msra.mxu0 %v1931
  %1984 = vmatprep.subr.mxu0 %v1930
  %1985 = vmatpush2.msra.mxu0 %v1929
  %1986 = vmatprep.subr.mxu0 %v1928
  %1987 = vmatpush2.msra.mxu0 %v1927
  %1988 = vmatprep.subr.mxu0 %v1926
  %1989 = vmatpush2.msra.mxu0 %v1925
  %1990 = vmatprep.subr.mxu0 %v1924
  %1991 = vmatpush2.msra.mxu0 %v1923
  %1992 = vmatprep.subr.mxu0 %v1922
  %1993 = vmatpush2.msra.mxu0 %v1921
  %1994 = vmatprep.subr.mxu0 %v1920
  %1995 = vmatpush2.msra.mxu0 %v1919
  %1996 = vmatprep.subr.mxu0 %v1918
  %1997 = vmatpush2.msra.mxu0 %v1917
  %1998 = vmatprep.subr.mxu0 %v1916
  %1999 = vmatpush2.msra.mxu0 %v1915
  %2000 = vmatprep.subr.mxu0 %v1914
  %2001 = vmatpush2.msra.mxu0 %v1913
  %2002 = vmatprep.subr.mxu0 %v1912
  %2003 = vmatpush2.msra.mxu0 %v1911
  %2004 = vmatprep.subr.mxu0 %v1910
  %2005 = vmatpush2.msra.mxu0 %v1909
  %2006 = vmatprep.subr.mxu0 %v1908
  %2007 = vmatpush2.msra.mxu0 %v1907
  %2008 = vmatprep.mubr.f32.mxu0 %v1942
  %2009 = vmatmul.mubr.f32.gmra.mxu0 %v1940
  %v2010 = vpop.f32.mrf.mxu0
  %v2011 = vadd.f32 0.0, %v2010
  %v2012 = vpop.f32.mrf.mxu0
  %v2013 = vadd.f32 0.0, %v2012
  %2014 = vdwg.mxu0
  %v2017 = vcombine.low %v2011, %v2013
  %s2019 = scalar_lea.vmem %s3, 8
  %2020 = vst [vmem:[%s2019] sm:$0xff] %v2017
  // Predicated region
  $region14: #{spatial_transformer_2d.1} parent=0 // pred_check
    _
  $region15: #{spatial_transformer_2d.1} parent=0 // pred_check_branch
    %2022 = sbr.rel (0) target = $region17
  $region16: #{spatial_transformer_2d.1} parent=0 // pred_region
    _
  $region17: #{spatial_transformer_2d.1} parent=0 // pred_fallthru
    _
  // Predicated region
  $region18: #{spatial_transformer_2d.1} parent=0 // pred_check
    _
  $region19: #{spatial_transformer_2d.1} parent=0 // pred_check_branch
    %2024 = sbr.rel (0) target = $region21
  $region20: #{spatial_transformer_2d.1} parent=0 // pred_region
    _
  $region21: #{spatial_transformer_2d.1} parent=0 // pred_fallthru
    _

</llo_original>
